<compile_context>
chip_gen: v7x
topology: tpu7x:2x2x1
jax: 0.10.0
libtpu: 0.0.40
codegen_flags: <defaults>
</compile_context>

<pallas_src>
import jax
import jax.numpy as jnp
import numpy as np
from jax.experimental import pallas as pl
from jax.experimental.pallas import tpu as pltpu


def _gru_recurrence_kernel(lens_ref, gir_ref, giz_ref, gin_ref,
                           whr_ref, whz_ref, whn_ref, bhn_ref,
                           out_ref, hid_ref):
    """Single-invocation GRU recurrence (no grid; everything resident in VMEM).

    lens_ref        : (B, 1)    int32  valid length per batch row
    gir/giz/gin_ref : (T, B, H) f32    hoisted input projections (+ fused biases)
    whr/whz/whn_ref : (H, H)    bf16   per-gate recurrent weights (transposed)
    bhn_ref         : (1, H)    f32    recurrent bias of the n gate (kept separate)
    out_ref         : (T, B, H) f32    padded GRU outputs (0 where t >= len)
    hid_ref         : (B, H)    f32    final hidden state per sequence
    """
    T, B, H = out_ref.shape
    lens = lens_ref[...]                 # (B, 1)
    whr = whr_ref[...]
    whz = whz_ref[...]
    whn = whn_ref[...]
    bhn = bhn_ref[...]

    h = jnp.zeros((B, H), jnp.float32)   # init_hidden: zeros

    # T is small and static: fully unrolled. Each step: 3 tiny MXU dots (bf16
    # operands, f32 accumulation) + VPU/EUP gate math, no cross-lane slicing.
    for t in range(T):
        h_b = h.astype(whr.dtype)
        r = jax.nn.sigmoid(
            gir_ref[t] + jnp.dot(h_b, whr, preferred_element_type=jnp.float32))
        z = jax.nn.sigmoid(
            giz_ref[t] + jnp.dot(h_b, whz, preferred_element_type=jnp.float32))
        hn = jnp.dot(h_b, whn, preferred_element_type=jnp.float32) + bhn
        n = jnp.tanh(gin_ref[t] + r * hn)
        h_new = (1.0 - z) * n + z * h

        # pack_padded_sequence semantics: steps past a sequence's length are not
        # processed (hidden frozen) and padded outputs are zero.
        valid = t < lens                              # (B, 1) bool
        h = jnp.where(valid, h_new, h)
        out_ref[t] = jnp.where(valid, h_new, 0.0).astype(out_ref.dtype)

    hid_ref[...] = h.astype(hid_ref.dtype)


def encoder_forward(params, inputs, input_lengths):
    """inputs: (B, T) int32 token ids; input_lengths: (B,) int32 (descending).
    Returns (outputs (B, T, H), hidden (B, 1, H)) — same as the PyTorch module."""
    emb = params["embedding"]                          # (V, E)
    embedded = emb[inputs].astype(jnp.float32)         # (B, T, E)  gather — XLA glue
    # TODO(synk): training-mode dropout (p=0.5) not replicated; nn.Dropout in
    # eval mode is identity, which is what this deterministic kernel implements.
    B, T, E = embedded.shape
    H = params["w_hh"].shape[1]

    x_tbe = jnp.transpose(embedded, (1, 0, 2))         # (T, B, E) time-major

    w_ih = params["w_ih"].astype(jnp.float32)          # (3H, E), gate order r, z, n
    w_hh = params["w_hh"].astype(jnp.float32)          # (3H, H)
    b_ih = params["b_ih"].astype(jnp.float32)          # (3H,)
    b_hh = params["b_hh"].astype(jnp.float32)          # (3H,)

    # Hoisted input projection: one (T*B, E) @ (E, 3H) matmul, outside the serial loop.
    gi = jnp.dot(x_tbe.reshape(T * B, E), w_ih.T).reshape(T, B, 3 * H)
    # Fuse r/z biases (b_ih + b_hh); the n-gate b_hn must stay inside r*(...).
    gi_r = gi[..., 0 * H:1 * H] + (b_ih[0 * H:1 * H] + b_hh[0 * H:1 * H])
    gi_z = gi[..., 1 * H:2 * H] + (b_ih[1 * H:2 * H] + b_hh[1 * H:2 * H])
    gi_n = gi[..., 2 * H:3 * H] + b_ih[2 * H:3 * H]

    # Per-gate recurrent weights (transposed) so gate results never need lane
    # slicing inside the loop; bf16 operands, f32 accumulation.
    whh_t = w_hh.T                                     # (H, 3H)
    rw_dtype = jnp.bfloat16
    whr = whh_t[:, 0 * H:1 * H].astype(rw_dtype)
    whz = whh_t[:, 1 * H:2 * H].astype(rw_dtype)
    whn = whh_t[:, 2 * H:3 * H].astype(rw_dtype)
    bhn = b_hh[2 * H:3 * H].reshape(1, H)

    lens2 = jnp.asarray(input_lengths).reshape(B, 1).astype(jnp.int32)

    vmem = pl.BlockSpec(memory_space=pltpu.MemorySpace.VMEM)
    cost = pl.CostEstimate(
        flops=2 * T * B * 3 * H * H + 14 * T * B * H,
        transcendentals=3 * T * B * H,
        bytes_accessed=(3 * T * B * H * 4      # gi_r/gi_z/gi_n in
                        + 3 * H * H * 2 + H * 4  # recurrent weights + bias
                        + T * B * H * 4          # outputs
                        + B * H * 4 + B * 4),    # hidden + lens
    )

    out_tbh, hidden = pl.pallas_call(
        _gru_recurrence_kernel,
        out_shape=(
            jax.ShapeDtypeStruct((T, B, H), jnp.float32),
            jax.ShapeDtypeStruct((B, H), jnp.float32),
        ),
        in_specs=[vmem] * 8,
        out_specs=(vmem, vmem),
        cost_estimate=cost,
    )(lens2, gi_r, gi_z, gi_n, whr, whz, whn, bhn)

    outputs = jnp.transpose(out_tbh, (1, 0, 2))        # (B, T, H) batch-first
    return outputs, hidden[:, None, :]                 # (B, 1, H)


def _reference_forward(params, inputs, input_lengths):
    """Pure-JAX f32 reference of the same math (for sanity checking)."""
    emb = params["embedding"][inputs].astype(jnp.float32)   # (B, T, E)
    B, T, E = emb.shape
    H = params["w_hh"].shape[1]
    wih_t, whh_t = params["w_ih"].T, params["w_hh"].T
    b_ih, b_hh = params["b_ih"], params["b_hh"]
    h = jnp.zeros((B, H), jnp.float32)
    outs = []
    for t in range(T):
        x_t = emb[:, t, :]
        gi = x_t @ wih_t + b_ih
        gh = h @ whh_t + b_hh
        r = jax.nn.sigmoid(gi[:, :H] + gh[:, :H])
        z = jax.nn.sigmoid(gi[:, H:2 * H] + gh[:, H:2 * H])
        n = jnp.tanh(gi[:, 2 * H:] + r * gh[:, 2 * H:])
        h_new = (1.0 - z) * n + z * h
        valid = (t < input_lengths)[:, None]
        h = jnp.where(valid, h_new, h)
        outs.append(jnp.where(valid, h_new, 0.0))
    outputs = jnp.stack(outs, axis=1)
    return outputs, h[:, None, :]


if __name__ == "__main__":
    # Small shapes consistent with the module: vocab=50, E=32, H=32, B=2, T=8.
    V, E, H = 50, 32, 32
    B, T = 2, 8

    key = jax.random.PRNGKey(0)
    k_emb, k_wih, k_whh, k_bih, k_bhh, k_tok = jax.random.split(key, 6)

    params = {
        "embedding": jax.random.normal(k_emb, (V, E), jnp.float32) * 0.1,
        "w_ih": jax.random.normal(k_wih, (3 * H, E), jnp.float32) * 0.1,   # (3H, E)
        "w_hh": jax.random.normal(k_whh, (3 * H, H), jnp.float32) * 0.1,   # (3H, H)
        "b_ih": jax.random.normal(k_bih, (3 * H,), jnp.float32) * 0.01,
        "b_hh": jax.random.normal(k_bhh, (3 * H,), jnp.float32) * 0.01,
    }

    inputs = jax.random.randint(k_tok, (B, T), 0, V, dtype=jnp.int32)   # (B, T) token ids
    input_lengths = jnp.array([T, 5], dtype=jnp.int32)                  # sorted descending

    outputs, hidden = encoder_forward(params, inputs, input_lengths)
    outputs = jax.block_until_ready(outputs)
    hidden = jax.block_until_ready(hidden)

    ref_out, ref_hid = _reference_forward(params, inputs, input_lengths)
    np.testing.assert_allclose(np.asarray(outputs), np.asarray(ref_out), atol=2e-2, rtol=2e-2)
    np.testing.assert_allclose(np.asarray(hidden), np.asarray(ref_hid), atol=2e-2, rtol=2e-2)

    assert outputs.shape == (B, T, H) and hidden.shape == (B, 1, H)
    print("KERNEL_OK")
</pallas_src>

<mosaic_0001>
module attributes {stable_mosaic.version = 11 : i64} {
  func.func @_gru_recurrence_kernel(%arg0: memref<2x1xi32, #tpu.memory_space<vmem>>, %arg1: memref<8x2x32xf32, #tpu.memory_space<vmem>>, %arg2: memref<8x2x32xf32, #tpu.memory_space<vmem>>, %arg3: memref<8x2x32xf32, #tpu.memory_space<vmem>>, %arg4: memref<32x32xbf16, #tpu.memory_space<vmem>>, %arg5: memref<32x32xbf16, #tpu.memory_space<vmem>>, %arg6: memref<32x32xbf16, #tpu.memory_space<vmem>>, %arg7: memref<1x32xf32, #tpu.memory_space<vmem>>, %arg8: memref<8x2x32xf32, #tpu.memory_space<vmem>>, %arg9: memref<2x32xf32, #tpu.memory_space<vmem>>) attributes {dimension_semantics = [], scalar_prefetch = 0 : i64, scratch_operands = 0 : i64, tpu.core_type = #tpu.core_type<tc>} {
    %c0 = arith.constant 0 : index
    %c0_0 = arith.constant 0 : index
    %0 = vector.load %arg0[%c0, %c0_0] : memref<2x1xi32, #tpu.memory_space<vmem>>, vector<2x1xi32>
    %c0_1 = arith.constant 0 : index
    %c0_2 = arith.constant 0 : index
    %1 = vector.load %arg4[%c0_1, %c0_2] : memref<32x32xbf16, #tpu.memory_space<vmem>>, vector<32x32xbf16>
    %c0_3 = arith.constant 0 : index
    %c0_4 = arith.constant 0 : index
    %2 = vector.load %arg5[%c0_3, %c0_4] : memref<32x32xbf16, #tpu.memory_space<vmem>>, vector<32x32xbf16>
    %c0_5 = arith.constant 0 : index
    %c0_6 = arith.constant 0 : index
    %3 = vector.load %arg6[%c0_5, %c0_6] : memref<32x32xbf16, #tpu.memory_space<vmem>>, vector<32x32xbf16>
    %c0_7 = arith.constant 0 : index
    %c0_8 = arith.constant 0 : index
    %4 = vector.load %arg7[%c0_7, %c0_8] : memref<1x32xf32, #tpu.memory_space<vmem>>, vector<1x32xf32>
    %cst = arith.constant 0.000000e+00 : f32
    %5 = vector.broadcast %cst : f32 to vector<2x32xf32>
    %6 = arith.truncf %5 : vector<2x32xf32> to vector<2x32xbf16>
    %c0_9 = arith.constant 0 : index
    %c0_10 = arith.constant 0 : index
    %c0_11 = arith.constant 0 : index
    %7 = vector.load %arg1[%c0_9, %c0_10, %c0_11] : memref<8x2x32xf32, #tpu.memory_space<vmem>>, vector<1x2x32xf32>
    %8 = vector.shape_cast %7 : vector<1x2x32xf32> to vector<2x32xf32>
    %cst_12 = arith.constant dense<0.000000e+00> : vector<2x32xf32>
    %9 = tpu.matmul %6, %1, %cst_12 {dimension_numbers = #tpu.dot_dimension_numbers<[1], [0], [0], [1], [0, 0, 1, 1], [], []>} : vector<2x32xbf16>, vector<32x32xbf16>, vector<2x32xf32> -> vector<2x32xf32>
    %10 = arith.addf %8, %9 : vector<2x32xf32>
    %11 = arith.negf %10 : vector<2x32xf32>
    %12 = math.exp %11 : vector<2x32xf32>
    %cst_13 = arith.constant 1.000000e+00 : f32
    %13 = vector.broadcast %cst_13 : f32 to vector<2x32xf32>
    %14 = arith.addf %13, %12 : vector<2x32xf32>
    %15 = arith.divf %13, %14 : vector<2x32xf32>
    %c0_14 = arith.constant 0 : index
    %c0_15 = arith.constant 0 : index
    %c0_16 = arith.constant 0 : index
    %16 = vector.load %arg2[%c0_14, %c0_15, %c0_16] : memref<8x2x32xf32, #tpu.memory_space<vmem>>, vector<1x2x32xf32>
    %17 = vector.shape_cast %16 : vector<1x2x32xf32> to vector<2x32xf32>
    %cst_17 = arith.constant dense<0.000000e+00> : vector<2x32xf32>
    %18 = tpu.matmul %6, %2, %cst_17 {dimension_numbers = #tpu.dot_dimension_numbers<[1], [0], [0], [1], [0, 0, 1, 1], [], []>} : vector<2x32xbf16>, vector<32x32xbf16>, vector<2x32xf32> -> vector<2x32xf32>
    %19 = arith.addf %17, %18 : vector<2x32xf32>
    %20 = arith.negf %19 : vector<2x32xf32>
    %21 = math.exp %20 : vector<2x32xf32>
    %cst_18 = arith.constant 1.000000e+00 : f32
    %22 = vector.broadcast %cst_18 : f32 to vector<2x32xf32>
    %23 = arith.addf %22, %21 : vector<2x32xf32>
    %24 = arith.divf %22, %23 : vector<2x32xf32>
    %cst_19 = arith.constant dense<0.000000e+00> : vector<2x32xf32>
    %25 = tpu.matmul %6, %3, %cst_19 {dimension_numbers = #tpu.dot_dimension_numbers<[1], [0], [0], [1], [0, 0, 1, 1], [], []>} : vector<2x32xbf16>, vector<32x32xbf16>, vector<2x32xf32> -> vector<2x32xf32>
    %26 = vector.broadcast %4 : vector<1x32xf32> to vector<2x32xf32>
    %27 = arith.addf %25, %26 : vector<2x32xf32>
    %c0_20 = arith.constant 0 : index
    %c0_21 = arith.constant 0 : index
    %c0_22 = arith.constant 0 : index
    %28 = vector.load %arg3[%c0_20, %c0_21, %c0_22] : memref<8x2x32xf32, #tpu.memory_space<vmem>>, vector<1x2x32xf32>
    %29 = vector.shape_cast %28 : vector<1x2x32xf32> to vector<2x32xf32>
    %30 = arith.mulf %15, %27 : vector<2x32xf32>
    %31 = arith.addf %29, %30 : vector<2x32xf32>
    %32 = math.tanh %31 : vector<2x32xf32>
    %cst_23 = arith.constant 1.000000e+00 : f32
    %33 = vector.broadcast %cst_23 : f32 to vector<2x32xf32>
    %34 = arith.subf %33, %24 : vector<2x32xf32>
    %35 = arith.mulf %34, %32 : vector<2x32xf32>
    %36 = arith.mulf %24, %5 : vector<2x32xf32>
    %37 = arith.addf %35, %36 : vector<2x32xf32>
    %c0_i32 = arith.constant 0 : i32
    %38 = vector.broadcast %c0_i32 : i32 to vector<2x1xi32>
    %39 = arith.cmpi sgt, %0, %38 : vector<2x1xi32>
    %40 = vector.shape_cast %39 : vector<2x1xi1> to vector<2x1xi1>
    %41 = vector.broadcast %40 : vector<2x1xi1> to vector<2x32xi1>
    %42 = arith.select %41, %37, %5 : vector<2x32xi1>, vector<2x32xf32>
    %cst_24 = arith.constant 0.000000e+00 : f32
    %43 = vector.shape_cast %39 : vector<2x1xi1> to vector<2x1xi1>
    %44 = vector.broadcast %43 : vector<2x1xi1> to vector<2x32xi1>
    %45 = vector.broadcast %cst_24 : f32 to vector<2x32xf32>
    %46 = arith.select %44, %37, %45 : vector<2x32xi1>, vector<2x32xf32>
    %c0_25 = arith.constant 0 : index
    %c0_26 = arith.constant 0 : index
    %c0_27 = arith.constant 0 : index
    %47 = vector.load %arg8[%c0_25, %c0_26, %c0_27] : memref<8x2x32xf32, #tpu.memory_space<vmem>>, vector<1x2x32xf32>
    %48 = vector.shape_cast %47 : vector<1x2x32xf32> to vector<2x32xf32>
    %49 = vector.shape_cast %46 : vector<2x32xf32> to vector<1x2x32xf32>
    tpu.vector_store %arg8[%c0_25, %c0_26, %c0_27], %49 {strides = array<i32>} : memref<8x2x32xf32, #tpu.memory_space<vmem>>, vector<1x2x32xf32>,
    %50 = arith.truncf %42 : vector<2x32xf32> to vector<2x32xbf16>
    %c1 = arith.constant 1 : index
    %c0_28 = arith.constant 0 : index
    %c0_29 = arith.constant 0 : index
    %51 = vector.load %arg1[%c1, %c0_28, %c0_29] : memref<8x2x32xf32, #tpu.memory_space<vmem>>, vector<1x2x32xf32>
    %52 = vector.shape_cast %51 : vector<1x2x32xf32> to vector<2x32xf32>
    %cst_30 = arith.constant dense<0.000000e+00> : vector<2x32xf32>
    %53 = tpu.matmul %50, %1, %cst_30 {dimension_numbers = #tpu.dot_dimension_numbers<[1], [0], [0], [1], [0, 0, 1, 1], [], []>} : vector<2x32xbf16>, vector<32x32xbf16>, vector<2x32xf32> -> vector<2x32xf32>
    %54 = arith.addf %52, %53 : vector<2x32xf32>
    %55 = arith.negf %54 : vector<2x32xf32>
    %56 = math.exp %55 : vector<2x32xf32>
    %cst_31 = arith.constant 1.000000e+00 : f32
    %57 = vector.broadcast %cst_31 : f32 to vector<2x32xf32>
    %58 = arith.addf %57, %56 : vector<2x32xf32>
    %59 = arith.divf %57, %58 : vector<2x32xf32>
    %c1_32 = arith.constant 1 : index
    %c0_33 = arith.constant 0 : index
    %c0_34 = arith.constant 0 : index
    %60 = vector.load %arg2[%c1_32, %c0_33, %c0_34] : memref<8x2x32xf32, #tpu.memory_space<vmem>>, vector<1x2x32xf32>
    %61 = vector.shape_cast %60 : vector<1x2x32xf32> to vector<2x32xf32>
    %cst_35 = arith.constant dense<0.000000e+00> : vector<2x32xf32>
    %62 = tpu.matmul %50, %2, %cst_35 {dimension_numbers = #tpu.dot_dimension_numbers<[1], [0], [0], [1], [0, 0, 1, 1], [], []>} : vector<2x32xbf16>, vector<32x32xbf16>, vector<2x32xf32> -> vector<2x32xf32>
    %63 = arith.addf %61, %62 : vector<2x32xf32>
    %64 = arith.negf %63 : vector<2x32xf32>
    %65 = math.exp %64 : vector<2x32xf32>
    %cst_36 = arith.constant 1.000000e+00 : f32
    %66 = vector.broadcast %cst_36 : f32 to vector<2x32xf32>
    %67 = arith.addf %66, %65 : vector<2x32xf32>
    %68 = arith.divf %66, %67 : vector<2x32xf32>
    %cst_37 = arith.constant dense<0.000000e+00> : vector<2x32xf32>
    %69 = tpu.matmul %50, %3, %cst_37 {dimension_numbers = #tpu.dot_dimension_numbers<[1], [0], [0], [1], [0, 0, 1, 1], [], []>} : vector<2x32xbf16>, vector<32x32xbf16>, vector<2x32xf32> -> vector<2x32xf32>
    %70 = vector.broadcast %4 : vector<1x32xf32> to vector<2x32xf32>
    %71 = arith.addf %69, %70 : vector<2x32xf32>
    %c1_38 = arith.constant 1 : index
    %c0_39 = arith.constant 0 : index
    %c0_40 = arith.constant 0 : index
    %72 = vector.load %arg3[%c1_38, %c0_39, %c0_40] : memref<8x2x32xf32, #tpu.memory_space<vmem>>, vector<1x2x32xf32>
    %73 = vector.shape_cast %72 : vector<1x2x32xf32> to vector<2x32xf32>
    %74 = arith.mulf %59, %71 : vector<2x32xf32>
    %75 = arith.addf %73, %74 : vector<2x32xf32>
    %76 = math.tanh %75 : vector<2x32xf32>
    %cst_41 = arith.constant 1.000000e+00 : f32
    %77 = vector.broadcast %cst_41 : f32 to vector<2x32xf32>
    %78 = arith.subf %77, %68 : vector<2x32xf32>
    %79 = arith.mulf %78, %76 : vector<2x32xf32>
    %80 = arith.mulf %68, %42 : vector<2x32xf32>
    %81 = arith.addf %79, %80 : vector<2x32xf32>
    %c1_i32 = arith.constant 1 : i32
    %82 = vector.broadcast %c1_i32 : i32 to vector<2x1xi32>
    %83 = arith.cmpi sgt, %0, %82 : vector<2x1xi32>
    %84 = vector.shape_cast %83 : vector<2x1xi1> to vector<2x1xi1>
    %85 = vector.broadcast %84 : vector<2x1xi1> to vector<2x32xi1>
    %86 = arith.select %85, %81, %42 : vector<2x32xi1>, vector<2x32xf32>
    %cst_42 = arith.constant 0.000000e+00 : f32
    %87 = vector.shape_cast %83 : vector<2x1xi1> to vector<2x1xi1>
    %88 = vector.broadcast %87 : vector<2x1xi1> to vector<2x32xi1>
    %89 = vector.broadcast %cst_42 : f32 to vector<2x32xf32>
    %90 = arith.select %88, %81, %89 : vector<2x32xi1>, vector<2x32xf32>
    %c1_43 = arith.constant 1 : index
    %c0_44 = arith.constant 0 : index
    %c0_45 = arith.constant 0 : index
    %91 = vector.load %arg8[%c1_43, %c0_44, %c0_45] : memref<8x2x32xf32, #tpu.memory_space<vmem>>, vector<1x2x32xf32>
    %92 = vector.shape_cast %91 : vector<1x2x32xf32> to vector<2x32xf32>
    %93 = vector.shape_cast %90 : vector<2x32xf32> to vector<1x2x32xf32>
    tpu.vector_store %arg8[%c1_43, %c0_44, %c0_45], %93 {strides = array<i32>} : memref<8x2x32xf32, #tpu.memory_space<vmem>>, vector<1x2x32xf32>,
    %94 = arith.truncf %86 : vector<2x32xf32> to vector<2x32xbf16>
    %c2 = arith.constant 2 : index
    %c0_46 = arith.constant 0 : index
    %c0_47 = arith.constant 0 : index
    %95 = vector.load %arg1[%c2, %c0_46, %c0_47] : memref<8x2x32xf32, #tpu.memory_space<vmem>>, vector<1x2x32xf32>
    %96 = vector.shape_cast %95 : vector<1x2x32xf32> to vector<2x32xf32>
    %cst_48 = arith.constant dense<0.000000e+00> : vector<2x32xf32>
    %97 = tpu.matmul %94, %1, %cst_48 {dimension_numbers = #tpu.dot_dimension_numbers<[1], [0], [0], [1], [0, 0, 1, 1], [], []>} : vector<2x32xbf16>, vector<32x32xbf16>, vector<2x32xf32> -> vector<2x32xf32>
    %98 = arith.addf %96, %97 : vector<2x32xf32>
    %99 = arith.negf %98 : vector<2x32xf32>
    %100 = math.exp %99 : vector<2x32xf32>
    %cst_49 = arith.constant 1.000000e+00 : f32
    %101 = vector.broadcast %cst_49 : f32 to vector<2x32xf32>
    %102 = arith.addf %101, %100 : vector<2x32xf32>
    %103 = arith.divf %101, %102 : vector<2x32xf32>
    %c2_50 = arith.constant 2 : index
    %c0_51 = arith.constant 0 : index
    %c0_52 = arith.constant 0 : index
    %104 = vector.load %arg2[%c2_50, %c0_51, %c0_52] : memref<8x2x32xf32, #tpu.memory_space<vmem>>, vector<1x2x32xf32>
    %105 = vector.shape_cast %104 : vector<1x2x32xf32> to vector<2x32xf32>
    %cst_53 = arith.constant dense<0.000000e+00> : vector<2x32xf32>
    %106 = tpu.matmul %94, %2, %cst_53 {dimension_numbers = #tpu.dot_dimension_numbers<[1], [0], [0], [1], [0, 0, 1, 1], [], []>} : vector<2x32xbf16>, vector<32x32xbf16>, vector<2x32xf32> -> vector<2x32xf32>
    %107 = arith.addf %105, %106 : vector<2x32xf32>
    %108 = arith.negf %107 : vector<2x32xf32>
    %109 = math.exp %108 : vector<2x32xf32>
    %cst_54 = arith.constant 1.000000e+00 : f32
    %110 = vector.broadcast %cst_54 : f32 to vector<2x32xf32>
    %111 = arith.addf %110, %109 : vector<2x32xf32>
    %112 = arith.divf %110, %111 : vector<2x32xf32>
    %cst_55 = arith.constant dense<0.000000e+00> : vector<2x32xf32>
    %113 = tpu.matmul %94, %3, %cst_55 {dimension_numbers = #tpu.dot_dimension_numbers<[1], [0], [0], [1], [0, 0, 1, 1], [], []>} : vector<2x32xbf16>, vector<32x32xbf16>, vector<2x32xf32> -> vector<2x32xf32>
    %114 = vector.broadcast %4 : vector<1x32xf32> to vector<2x32xf32>
    %115 = arith.addf %113, %114 : vector<2x32xf32>
    %c2_56 = arith.constant 2 : index
    %c0_57 = arith.constant 0 : index
    %c0_58 = arith.constant 0 : index
    %116 = vector.load %arg3[%c2_56, %c0_57, %c0_58] : memref<8x2x32xf32, #tpu.memory_space<vmem>>, vector<1x2x32xf32>
    %117 = vector.shape_cast %116 : vector<1x2x32xf32> to vector<2x32xf32>
    %118 = arith.mulf %103, %115 : vector<2x32xf32>
    %119 = arith.addf %117, %118 : vector<2x32xf32>
    %120 = math.tanh %119 : vector<2x32xf32>
    %cst_59 = arith.constant 1.000000e+00 : f32
    %121 = vector.broadcast %cst_59 : f32 to vector<2x32xf32>
    %122 = arith.subf %121, %112 : vector<2x32xf32>
    %123 = arith.mulf %122, %120 : vector<2x32xf32>
    %124 = arith.mulf %112, %86 : vector<2x32xf32>
    %125 = arith.addf %123, %124 : vector<2x32xf32>
    %c2_i32 = arith.constant 2 : i32
    %126 = vector.broadcast %c2_i32 : i32 to vector<2x1xi32>
    %127 = arith.cmpi sgt, %0, %126 : vector<2x1xi32>
    %128 = vector.shape_cast %127 : vector<2x1xi1> to vector<2x1xi1>
    %129 = vector.broadcast %128 : vector<2x1xi1> to vector<2x32xi1>
    %130 = arith.select %129, %125, %86 : vector<2x32xi1>, vector<2x32xf32>
    %cst_60 = arith.constant 0.000000e+00 : f32
    %131 = vector.shape_cast %127 : vector<2x1xi1> to vector<2x1xi1>
    %132 = vector.broadcast %131 : vector<2x1xi1> to vector<2x32xi1>
    %133 = vector.broadcast %cst_60 : f32 to vector<2x32xf32>
    %134 = arith.select %132, %125, %133 : vector<2x32xi1>, vector<2x32xf32>
    %c2_61 = arith.constant 2 : index
    %c0_62 = arith.constant 0 : index
    %c0_63 = arith.constant 0 : index
    %135 = vector.load %arg8[%c2_61, %c0_62, %c0_63] : memref<8x2x32xf32, #tpu.memory_space<vmem>>, vector<1x2x32xf32>
    %136 = vector.shape_cast %135 : vector<1x2x32xf32> to vector<2x32xf32>
    %137 = vector.shape_cast %134 : vector<2x32xf32> to vector<1x2x32xf32>
    tpu.vector_store %arg8[%c2_61, %c0_62, %c0_63], %137 {strides = array<i32>} : memref<8x2x32xf32, #tpu.memory_space<vmem>>, vector<1x2x32xf32>,
    %138 = arith.truncf %130 : vector<2x32xf32> to vector<2x32xbf16>
    %c3 = arith.constant 3 : index
    %c0_64 = arith.constant 0 : index
    %c0_65 = arith.constant 0 : index
    %139 = vector.load %arg1[%c3, %c0_64, %c0_65] : memref<8x2x32xf32, #tpu.memory_space<vmem>>, vector<1x2x32xf32>
    %140 = vector.shape_cast %139 : vector<1x2x32xf32> to vector<2x32xf32>
    %cst_66 = arith.constant dense<0.000000e+00> : vector<2x32xf32>
    %141 = tpu.matmul %138, %1, %cst_66 {dimension_numbers = #tpu.dot_dimension_numbers<[1], [0], [0], [1], [0, 0, 1, 1], [], []>} : vector<2x32xbf16>, vector<32x32xbf16>, vector<2x32xf32> -> vector<2x32xf32>
    %142 = arith.addf %140, %141 : vector<2x32xf32>
    %143 = arith.negf %142 : vector<2x32xf32>
    %144 = math.exp %143 : vector<2x32xf32>
    %cst_67 = arith.constant 1.000000e+00 : f32
    %145 = vector.broadcast %cst_67 : f32 to vector<2x32xf32>
    %146 = arith.addf %145, %144 : vector<2x32xf32>
    %147 = arith.divf %145, %146 : vector<2x32xf32>
    %c3_68 = arith.constant 3 : index
    %c0_69 = arith.constant 0 : index
    %c0_70 = arith.constant 0 : index
    %148 = vector.load %arg2[%c3_68, %c0_69, %c0_70] : memref<8x2x32xf32, #tpu.memory_space<vmem>>, vector<1x2x32xf32>
    %149 = vector.shape_cast %148 : vector<1x2x32xf32> to vector<2x32xf32>
    %cst_71 = arith.constant dense<0.000000e+00> : vector<2x32xf32>
    %150 = tpu.matmul %138, %2, %cst_71 {dimension_numbers = #tpu.dot_dimension_numbers<[1], [0], [0], [1], [0, 0, 1, 1], [], []>} : vector<2x32xbf16>, vector<32x32xbf16>, vector<2x32xf32> -> vector<2x32xf32>
    %151 = arith.addf %149, %150 : vector<2x32xf32>
    %152 = arith.negf %151 : vector<2x32xf32>
    %153 = math.exp %152 : vector<2x32xf32>
    %cst_72 = arith.constant 1.000000e+00 : f32
    %154 = vector.broadcast %cst_72 : f32 to vector<2x32xf32>
    %155 = arith.addf %154, %153 : vector<2x32xf32>
    %156 = arith.divf %154, %155 : vector<2x32xf32>
    %cst_73 = arith.constant dense<0.000000e+00> : vector<2x32xf32>
    %157 = tpu.matmul %138, %3, %cst_73 {dimension_numbers = #tpu.dot_dimension_numbers<[1], [0], [0], [1], [0, 0, 1, 1], [], []>} : vector<2x32xbf16>, vector<32x32xbf16>, vector<2x32xf32> -> vector<2x32xf32>
    %158 = vector.broadcast %4 : vector<1x32xf32> to vector<2x32xf32>
    %159 = arith.addf %157, %158 : vector<2x32xf32>
    %c3_74 = arith.constant 3 : index
    %c0_75 = arith.constant 0 : index
    %c0_76 = arith.constant 0 : index
    %160 = vector.load %arg3[%c3_74, %c0_75, %c0_76] : memref<8x2x32xf32, #tpu.memory_space<vmem>>, vector<1x2x32xf32>
    %161 = vector.shape_cast %160 : vector<1x2x32xf32> to vector<2x32xf32>
    %162 = arith.mulf %147, %159 : vector<2x32xf32>
    %163 = arith.addf %161, %162 : vector<2x32xf32>
    %164 = math.tanh %163 : vector<2x32xf32>
    %cst_77 = arith.constant 1.000000e+00 : f32
    %165 = vector.broadcast %cst_77 : f32 to vector<2x32xf32>
    %166 = arith.subf %165, %156 : vector<2x32xf32>
    %167 = arith.mulf %166, %164 : vector<2x32xf32>
    %168 = arith.mulf %156, %130 : vector<2x32xf32>
    %169 = arith.addf %167, %168 : vector<2x32xf32>
    %c3_i32 = arith.constant 3 : i32
    %170 = vector.broadcast %c3_i32 : i32 to vector<2x1xi32>
    %171 = arith.cmpi sgt, %0, %170 : vector<2x1xi32>
    %172 = vector.shape_cast %171 : vector<2x1xi1> to vector<2x1xi1>
    %173 = vector.broadcast %172 : vector<2x1xi1> to vector<2x32xi1>
    %174 = arith.select %173, %169, %130 : vector<2x32xi1>, vector<2x32xf32>
    %cst_78 = arith.constant 0.000000e+00 : f32
    %175 = vector.shape_cast %171 : vector<2x1xi1> to vector<2x1xi1>
    %176 = vector.broadcast %175 : vector<2x1xi1> to vector<2x32xi1>
    %177 = vector.broadcast %cst_78 : f32 to vector<2x32xf32>
    %178 = arith.select %176, %169, %177 : vector<2x32xi1>, vector<2x32xf32>
    %c3_79 = arith.constant 3 : index
    %c0_80 = arith.constant 0 : index
    %c0_81 = arith.constant 0 : index
    %179 = vector.load %arg8[%c3_79, %c0_80, %c0_81] : memref<8x2x32xf32, #tpu.memory_space<vmem>>, vector<1x2x32xf32>
    %180 = vector.shape_cast %179 : vector<1x2x32xf32> to vector<2x32xf32>
    %181 = vector.shape_cast %178 : vector<2x32xf32> to vector<1x2x32xf32>
    tpu.vector_store %arg8[%c3_79, %c0_80, %c0_81], %181 {strides = array<i32>} : memref<8x2x32xf32, #tpu.memory_space<vmem>>, vector<1x2x32xf32>,
    %182 = arith.truncf %174 : vector<2x32xf32> to vector<2x32xbf16>
    %c4 = arith.constant 4 : index
    %c0_82 = arith.constant 0 : index
    %c0_83 = arith.constant 0 : index
    %183 = vector.load %arg1[%c4, %c0_82, %c0_83] : memref<8x2x32xf32, #tpu.memory_space<vmem>>, vector<1x2x32xf32>
    %184 = vector.shape_cast %183 : vector<1x2x32xf32> to vector<2x32xf32>
    %cst_84 = arith.constant dense<0.000000e+00> : vector<2x32xf32>
    %185 = tpu.matmul %182, %1, %cst_84 {dimension_numbers = #tpu.dot_dimension_numbers<[1], [0], [0], [1], [0, 0, 1, 1], [], []>} : vector<2x32xbf16>, vector<32x32xbf16>, vector<2x32xf32> -> vector<2x32xf32>
    %186 = arith.addf %184, %185 : vector<2x32xf32>
    %187 = arith.negf %186 : vector<2x32xf32>
    %188 = math.exp %187 : vector<2x32xf32>
    %cst_85 = arith.constant 1.000000e+00 : f32
    %189 = vector.broadcast %cst_85 : f32 to vector<2x32xf32>
    %190 = arith.addf %189, %188 : vector<2x32xf32>
    %191 = arith.divf %189, %190 : vector<2x32xf32>
    %c4_86 = arith.constant 4 : index
    %c0_87 = arith.constant 0 : index
    %c0_88 = arith.constant 0 : index
    %192 = vector.load %arg2[%c4_86, %c0_87, %c0_88] : memref<8x2x32xf32, #tpu.memory_space<vmem>>, vector<1x2x32xf32>
    %193 = vector.shape_cast %192 : vector<1x2x32xf32> to vector<2x32xf32>
    %cst_89 = arith.constant dense<0.000000e+00> : vector<2x32xf32>
    %194 = tpu.matmul %182, %2, %cst_89 {dimension_numbers = #tpu.dot_dimension_numbers<[1], [0], [0], [1], [0, 0, 1, 1], [], []>} : vector<2x32xbf16>, vector<32x32xbf16>, vector<2x32xf32> -> vector<2x32xf32>
    %195 = arith.addf %193, %194 : vector<2x32xf32>
    %196 = arith.negf %195 : vector<2x32xf32>
    %197 = math.exp %196 : vector<2x32xf32>
    %cst_90 = arith.constant 1.000000e+00 : f32
    %198 = vector.broadcast %cst_90 : f32 to vector<2x32xf32>
    %199 = arith.addf %198, %197 : vector<2x32xf32>
    %200 = arith.divf %198, %199 : vector<2x32xf32>
    %cst_91 = arith.constant dense<0.000000e+00> : vector<2x32xf32>
    %201 = tpu.matmul %182, %3, %cst_91 {dimension_numbers = #tpu.dot_dimension_numbers<[1], [0], [0], [1], [0, 0, 1, 1], [], []>} : vector<2x32xbf16>, vector<32x32xbf16>, vector<2x32xf32> -> vector<2x32xf32>
    %202 = vector.broadcast %4 : vector<1x32xf32> to vector<2x32xf32>
    %203 = arith.addf %201, %202 : vector<2x32xf32>
    %c4_92 = arith.constant 4 : index
    %c0_93 = arith.constant 0 : index
    %c0_94 = arith.constant 0 : index
    %204 = vector.load %arg3[%c4_92, %c0_93, %c0_94] : memref<8x2x32xf32, #tpu.memory_space<vmem>>, vector<1x2x32xf32>
    %205 = vector.shape_cast %204 : vector<1x2x32xf32> to vector<2x32xf32>
    %206 = arith.mulf %191, %203 : vector<2x32xf32>
    %207 = arith.addf %205, %206 : vector<2x32xf32>
    %208 = math.tanh %207 : vector<2x32xf32>
    %cst_95 = arith.constant 1.000000e+00 : f32
    %209 = vector.broadcast %cst_95 : f32 to vector<2x32xf32>
    %210 = arith.subf %209, %200 : vector<2x32xf32>
    %211 = arith.mulf %210, %208 : vector<2x32xf32>
    %212 = arith.mulf %200, %174 : vector<2x32xf32>
    %213 = arith.addf %211, %212 : vector<2x32xf32>
    %c4_i32 = arith.constant 4 : i32
    %214 = vector.broadcast %c4_i32 : i32 to vector<2x1xi32>
    %215 = arith.cmpi sgt, %0, %214 : vector<2x1xi32>
    %216 = vector.shape_cast %215 : vector<2x1xi1> to vector<2x1xi1>
    %217 = vector.broadcast %216 : vector<2x1xi1> to vector<2x32xi1>
    %218 = arith.select %217, %213, %174 : vector<2x32xi1>, vector<2x32xf32>
    %cst_96 = arith.constant 0.000000e+00 : f32
    %219 = vector.shape_cast %215 : vector<2x1xi1> to vector<2x1xi1>
    %220 = vector.broadcast %219 : vector<2x1xi1> to vector<2x32xi1>
    %221 = vector.broadcast %cst_96 : f32 to vector<2x32xf32>
    %222 = arith.select %220, %213, %221 : vector<2x32xi1>, vector<2x32xf32>
    %c4_97 = arith.constant 4 : index
    %c0_98 = arith.constant 0 : index
    %c0_99 = arith.constant 0 : index
    %223 = vector.load %arg8[%c4_97, %c0_98, %c0_99] : memref<8x2x32xf32, #tpu.memory_space<vmem>>, vector<1x2x32xf32>
    %224 = vector.shape_cast %223 : vector<1x2x32xf32> to vector<2x32xf32>
    %225 = vector.shape_cast %222 : vector<2x32xf32> to vector<1x2x32xf32>
    tpu.vector_store %arg8[%c4_97, %c0_98, %c0_99], %225 {strides = array<i32>} : memref<8x2x32xf32, #tpu.memory_space<vmem>>, vector<1x2x32xf32>,
    %226 = arith.truncf %218 : vector<2x32xf32> to vector<2x32xbf16>
    %c5 = arith.constant 5 : index
    %c0_100 = arith.constant 0 : index
    %c0_101 = arith.constant 0 : index
    %227 = vector.load %arg1[%c5, %c0_100, %c0_101] : memref<8x2x32xf32, #tpu.memory_space<vmem>>, vector<1x2x32xf32>
    %228 = vector.shape_cast %227 : vector<1x2x32xf32> to vector<2x32xf32>
    %cst_102 = arith.constant dense<0.000000e+00> : vector<2x32xf32>
    %229 = tpu.matmul %226, %1, %cst_102 {dimension_numbers = #tpu.dot_dimension_numbers<[1], [0], [0], [1], [0, 0, 1, 1], [], []>} : vector<2x32xbf16>, vector<32x32xbf16>, vector<2x32xf32> -> vector<2x32xf32>
    %230 = arith.addf %228, %229 : vector<2x32xf32>
    %231 = arith.negf %230 : vector<2x32xf32>
    %232 = math.exp %231 : vector<2x32xf32>
    %cst_103 = arith.constant 1.000000e+00 : f32
    %233 = vector.broadcast %cst_103 : f32 to vector<2x32xf32>
    %234 = arith.addf %233, %232 : vector<2x32xf32>
    %235 = arith.divf %233, %234 : vector<2x32xf32>
    %c5_104 = arith.constant 5 : index
    %c0_105 = arith.constant 0 : index
    %c0_106 = arith.constant 0 : index
    %236 = vector.load %arg2[%c5_104, %c0_105, %c0_106] : memref<8x2x32xf32, #tpu.memory_space<vmem>>, vector<1x2x32xf32>
    %237 = vector.shape_cast %236 : vector<1x2x32xf32> to vector<2x32xf32>
    %cst_107 = arith.constant dense<0.000000e+00> : vector<2x32xf32>
    %238 = tpu.matmul %226, %2, %cst_107 {dimension_numbers = #tpu.dot_dimension_numbers<[1], [0], [0], [1], [0, 0, 1, 1], [], []>} : vector<2x32xbf16>, vector<32x32xbf16>, vector<2x32xf32> -> vector<2x32xf32>
    %239 = arith.addf %237, %238 : vector<2x32xf32>
    %240 = arith.negf %239 : vector<2x32xf32>
    %241 = math.exp %240 : vector<2x32xf32>
    %cst_108 = arith.constant 1.000000e+00 : f32
    %242 = vector.broadcast %cst_108 : f32 to vector<2x32xf32>
    %243 = arith.addf %242, %241 : vector<2x32xf32>
    %244 = arith.divf %242, %243 : vector<2x32xf32>
    %cst_109 = arith.constant dense<0.000000e+00> : vector<2x32xf32>
    %245 = tpu.matmul %226, %3, %cst_109 {dimension_numbers = #tpu.dot_dimension_numbers<[1], [0], [0], [1], [0, 0, 1, 1], [], []>} : vector<2x32xbf16>, vector<32x32xbf16>, vector<2x32xf32> -> vector<2x32xf32>
    %246 = vector.broadcast %4 : vector<1x32xf32> to vector<2x32xf32>
    %247 = arith.addf %245, %246 : vector<2x32xf32>
    %c5_110 = arith.constant 5 : index
    %c0_111 = arith.constant 0 : index
    %c0_112 = arith.constant 0 : index
    %248 = vector.load %arg3[%c5_110, %c0_111, %c0_112] : memref<8x2x32xf32, #tpu.memory_space<vmem>>, vector<1x2x32xf32>
    %249 = vector.shape_cast %248 : vector<1x2x32xf32> to vector<2x32xf32>
    %250 = arith.mulf %235, %247 : vector<2x32xf32>
    %251 = arith.addf %249, %250 : vector<2x32xf32>
    %252 = math.tanh %251 : vector<2x32xf32>
    %cst_113 = arith.constant 1.000000e+00 : f32
    %253 = vector.broadcast %cst_113 : f32 to vector<2x32xf32>
    %254 = arith.subf %253, %244 : vector<2x32xf32>
    %255 = arith.mulf %254, %252 : vector<2x32xf32>
    %256 = arith.mulf %244, %218 : vector<2x32xf32>
    %257 = arith.addf %255, %256 : vector<2x32xf32>
    %c5_i32 = arith.constant 5 : i32
    %258 = vector.broadcast %c5_i32 : i32 to vector<2x1xi32>
    %259 = arith.cmpi sgt, %0, %258 : vector<2x1xi32>
    %260 = vector.shape_cast %259 : vector<2x1xi1> to vector<2x1xi1>
    %261 = vector.broadcast %260 : vector<2x1xi1> to vector<2x32xi1>
    %262 = arith.select %261, %257, %218 : vector<2x32xi1>, vector<2x32xf32>
    %cst_114 = arith.constant 0.000000e+00 : f32
    %263 = vector.shape_cast %259 : vector<2x1xi1> to vector<2x1xi1>
    %264 = vector.broadcast %263 : vector<2x1xi1> to vector<2x32xi1>
    %265 = vector.broadcast %cst_114 : f32 to vector<2x32xf32>
    %266 = arith.select %264, %257, %265 : vector<2x32xi1>, vector<2x32xf32>
    %c5_115 = arith.constant 5 : index
    %c0_116 = arith.constant 0 : index
    %c0_117 = arith.constant 0 : index
    %267 = vector.load %arg8[%c5_115, %c0_116, %c0_117] : memref<8x2x32xf32, #tpu.memory_space<vmem>>, vector<1x2x32xf32>
    %268 = vector.shape_cast %267 : vector<1x2x32xf32> to vector<2x32xf32>
    %269 = vector.shape_cast %266 : vector<2x32xf32> to vector<1x2x32xf32>
    tpu.vector_store %arg8[%c5_115, %c0_116, %c0_117], %269 {strides = array<i32>} : memref<8x2x32xf32, #tpu.memory_space<vmem>>, vector<1x2x32xf32>,
    %270 = arith.truncf %262 : vector<2x32xf32> to vector<2x32xbf16>
    %c6 = arith.constant 6 : index
    %c0_118 = arith.constant 0 : index
    %c0_119 = arith.constant 0 : index
    %271 = vector.load %arg1[%c6, %c0_118, %c0_119] : memref<8x2x32xf32, #tpu.memory_space<vmem>>, vector<1x2x32xf32>
    %272 = vector.shape_cast %271 : vector<1x2x32xf32> to vector<2x32xf32>
    %cst_120 = arith.constant dense<0.000000e+00> : vector<2x32xf32>
    %273 = tpu.matmul %270, %1, %cst_120 {dimension_numbers = #tpu.dot_dimension_numbers<[1], [0], [0], [1], [0, 0, 1, 1], [], []>} : vector<2x32xbf16>, vector<32x32xbf16>, vector<2x32xf32> -> vector<2x32xf32>
    %274 = arith.addf %272, %273 : vector<2x32xf32>
    %275 = arith.negf %274 : vector<2x32xf32>
    %276 = math.exp %275 : vector<2x32xf32>
    %cst_121 = arith.constant 1.000000e+00 : f32
    %277 = vector.broadcast %cst_121 : f32 to vector<2x32xf32>
    %278 = arith.addf %277, %276 : vector<2x32xf32>
    %279 = arith.divf %277, %278 : vector<2x32xf32>
    %c6_122 = arith.constant 6 : index
    %c0_123 = arith.constant 0 : index
    %c0_124 = arith.constant 0 : index
    %280 = vector.load %arg2[%c6_122, %c0_123, %c0_124] : memref<8x2x32xf32, #tpu.memory_space<vmem>>, vector<1x2x32xf32>
    %281 = vector.shape_cast %280 : vector<1x2x32xf32> to vector<2x32xf32>
    %cst_125 = arith.constant dense<0.000000e+00> : vector<2x32xf32>
    %282 = tpu.matmul %270, %2, %cst_125 {dimension_numbers = #tpu.dot_dimension_numbers<[1], [0], [0], [1], [0, 0, 1, 1], [], []>} : vector<2x32xbf16>, vector<32x32xbf16>, vector<2x32xf32> -> vector<2x32xf32>
    %283 = arith.addf %281, %282 : vector<2x32xf32>
    %284 = arith.negf %283 : vector<2x32xf32>
    %285 = math.exp %284 : vector<2x32xf32>
    %cst_126 = arith.constant 1.000000e+00 : f32
    %286 = vector.broadcast %cst_126 : f32 to vector<2x32xf32>
    %287 = arith.addf %286, %285 : vector<2x32xf32>
    %288 = arith.divf %286, %287 : vector<2x32xf32>
    %cst_127 = arith.constant dense<0.000000e+00> : vector<2x32xf32>
    %289 = tpu.matmul %270, %3, %cst_127 {dimension_numbers = #tpu.dot_dimension_numbers<[1], [0], [0], [1], [0, 0, 1, 1], [], []>} : vector<2x32xbf16>, vector<32x32xbf16>, vector<2x32xf32> -> vector<2x32xf32>
    %290 = vector.broadcast %4 : vector<1x32xf32> to vector<2x32xf32>
    %291 = arith.addf %289, %290 : vector<2x32xf32>
    %c6_128 = arith.constant 6 : index
    %c0_129 = arith.constant 0 : index
    %c0_130 = arith.constant 0 : index
    %292 = vector.load %arg3[%c6_128, %c0_129, %c0_130] : memref<8x2x32xf32, #tpu.memory_space<vmem>>, vector<1x2x32xf32>
    %293 = vector.shape_cast %292 : vector<1x2x32xf32> to vector<2x32xf32>
    %294 = arith.mulf %279, %291 : vector<2x32xf32>
    %295 = arith.addf %293, %294 : vector<2x32xf32>
    %296 = math.tanh %295 : vector<2x32xf32>
    %cst_131 = arith.constant 1.000000e+00 : f32
    %297 = vector.broadcast %cst_131 : f32 to vector<2x32xf32>
    %298 = arith.subf %297, %288 : vector<2x32xf32>
    %299 = arith.mulf %298, %296 : vector<2x32xf32>
    %300 = arith.mulf %288, %262 : vector<2x32xf32>
    %301 = arith.addf %299, %300 : vector<2x32xf32>
    %c6_i32 = arith.constant 6 : i32
    %302 = vector.broadcast %c6_i32 : i32 to vector<2x1xi32>
    %303 = arith.cmpi sgt, %0, %302 : vector<2x1xi32>
    %304 = vector.shape_cast %303 : vector<2x1xi1> to vector<2x1xi1>
    %305 = vector.broadcast %304 : vector<2x1xi1> to vector<2x32xi1>
    %306 = arith.select %305, %301, %262 : vector<2x32xi1>, vector<2x32xf32>
    %cst_132 = arith.constant 0.000000e+00 : f32
    %307 = vector.shape_cast %303 : vector<2x1xi1> to vector<2x1xi1>
    %308 = vector.broadcast %307 : vector<2x1xi1> to vector<2x32xi1>
    %309 = vector.broadcast %cst_132 : f32 to vector<2x32xf32>
    %310 = arith.select %308, %301, %309 : vector<2x32xi1>, vector<2x32xf32>
    %c6_133 = arith.constant 6 : index
    %c0_134 = arith.constant 0 : index
    %c0_135 = arith.constant 0 : index
    %311 = vector.load %arg8[%c6_133, %c0_134, %c0_135] : memref<8x2x32xf32, #tpu.memory_space<vmem>>, vector<1x2x32xf32>
    %312 = vector.shape_cast %311 : vector<1x2x32xf32> to vector<2x32xf32>
    %313 = vector.shape_cast %310 : vector<2x32xf32> to vector<1x2x32xf32>
    tpu.vector_store %arg8[%c6_133, %c0_134, %c0_135], %313 {strides = array<i32>} : memref<8x2x32xf32, #tpu.memory_space<vmem>>, vector<1x2x32xf32>,
    %314 = arith.truncf %306 : vector<2x32xf32> to vector<2x32xbf16>
    %c7 = arith.constant 7 : index
    %c0_136 = arith.constant 0 : index
    %c0_137 = arith.constant 0 : index
    %315 = vector.load %arg1[%c7, %c0_136, %c0_137] : memref<8x2x32xf32, #tpu.memory_space<vmem>>, vector<1x2x32xf32>
    %316 = vector.shape_cast %315 : vector<1x2x32xf32> to vector<2x32xf32>
    %cst_138 = arith.constant dense<0.000000e+00> : vector<2x32xf32>
    %317 = tpu.matmul %314, %1, %cst_138 {dimension_numbers = #tpu.dot_dimension_numbers<[1], [0], [0], [1], [0, 0, 1, 1], [], []>} : vector<2x32xbf16>, vector<32x32xbf16>, vector<2x32xf32> -> vector<2x32xf32>
    %318 = arith.addf %316, %317 : vector<2x32xf32>
    %319 = arith.negf %318 : vector<2x32xf32>
    %320 = math.exp %319 : vector<2x32xf32>
    %cst_139 = arith.constant 1.000000e+00 : f32
    %321 = vector.broadcast %cst_139 : f32 to vector<2x32xf32>
    %322 = arith.addf %321, %320 : vector<2x32xf32>
    %323 = arith.divf %321, %322 : vector<2x32xf32>
    %c7_140 = arith.constant 7 : index
    %c0_141 = arith.constant 0 : index
    %c0_142 = arith.constant 0 : index
    %324 = vector.load %arg2[%c7_140, %c0_141, %c0_142] : memref<8x2x32xf32, #tpu.memory_space<vmem>>, vector<1x2x32xf32>
    %325 = vector.shape_cast %324 : vector<1x2x32xf32> to vector<2x32xf32>
    %cst_143 = arith.constant dense<0.000000e+00> : vector<2x32xf32>
    %326 = tpu.matmul %314, %2, %cst_143 {dimension_numbers = #tpu.dot_dimension_numbers<[1], [0], [0], [1], [0, 0, 1, 1], [], []>} : vector<2x32xbf16>, vector<32x32xbf16>, vector<2x32xf32> -> vector<2x32xf32>
    %327 = arith.addf %325, %326 : vector<2x32xf32>
    %328 = arith.negf %327 : vector<2x32xf32>
    %329 = math.exp %328 : vector<2x32xf32>
    %cst_144 = arith.constant 1.000000e+00 : f32
    %330 = vector.broadcast %cst_144 : f32 to vector<2x32xf32>
    %331 = arith.addf %330, %329 : vector<2x32xf32>
    %332 = arith.divf %330, %331 : vector<2x32xf32>
    %cst_145 = arith.constant dense<0.000000e+00> : vector<2x32xf32>
    %333 = tpu.matmul %314, %3, %cst_145 {dimension_numbers = #tpu.dot_dimension_numbers<[1], [0], [0], [1], [0, 0, 1, 1], [], []>} : vector<2x32xbf16>, vector<32x32xbf16>, vector<2x32xf32> -> vector<2x32xf32>
    %334 = vector.broadcast %4 : vector<1x32xf32> to vector<2x32xf32>
    %335 = arith.addf %333, %334 : vector<2x32xf32>
    %c7_146 = arith.constant 7 : index
    %c0_147 = arith.constant 0 : index
    %c0_148 = arith.constant 0 : index
    %336 = vector.load %arg3[%c7_146, %c0_147, %c0_148] : memref<8x2x32xf32, #tpu.memory_space<vmem>>, vector<1x2x32xf32>
    %337 = vector.shape_cast %336 : vector<1x2x32xf32> to vector<2x32xf32>
    %338 = arith.mulf %323, %335 : vector<2x32xf32>
    %339 = arith.addf %337, %338 : vector<2x32xf32>
    %340 = math.tanh %339 : vector<2x32xf32>
    %cst_149 = arith.constant 1.000000e+00 : f32
    %341 = vector.broadcast %cst_149 : f32 to vector<2x32xf32>
    %342 = arith.subf %341, %332 : vector<2x32xf32>
    %343 = arith.mulf %342, %340 : vector<2x32xf32>
    %344 = arith.mulf %332, %306 : vector<2x32xf32>
    %345 = arith.addf %343, %344 : vector<2x32xf32>
    %c7_i32 = arith.constant 7 : i32
    %346 = vector.broadcast %c7_i32 : i32 to vector<2x1xi32>
    %347 = arith.cmpi sgt, %0, %346 : vector<2x1xi32>
    %348 = vector.shape_cast %347 : vector<2x1xi1> to vector<2x1xi1>
    %349 = vector.broadcast %348 : vector<2x1xi1> to vector<2x32xi1>
    %350 = arith.select %349, %345, %306 : vector<2x32xi1>, vector<2x32xf32>
    %cst_150 = arith.constant 0.000000e+00 : f32
    %351 = vector.shape_cast %347 : vector<2x1xi1> to vector<2x1xi1>
    %352 = vector.broadcast %351 : vector<2x1xi1> to vector<2x32xi1>
    %353 = vector.broadcast %cst_150 : f32 to vector<2x32xf32>
    %354 = arith.select %352, %345, %353 : vector<2x32xi1>, vector<2x32xf32>
    %c7_151 = arith.constant 7 : index
    %c0_152 = arith.constant 0 : index
    %c0_153 = arith.constant 0 : index
    %355 = vector.load %arg8[%c7_151, %c0_152, %c0_153] : memref<8x2x32xf32, #tpu.memory_space<vmem>>, vector<1x2x32xf32>
    %356 = vector.shape_cast %355 : vector<1x2x32xf32> to vector<2x32xf32>
    %357 = vector.shape_cast %354 : vector<2x32xf32> to vector<1x2x32xf32>
    tpu.vector_store %arg8[%c7_151, %c0_152, %c0_153], %357 {strides = array<i32>} : memref<8x2x32xf32, #tpu.memory_space<vmem>>, vector<1x2x32xf32>,
    %c0_154 = arith.constant 0 : index
    %c0_155 = arith.constant 0 : index
    %358 = vector.load %arg9[%c0_154, %c0_155] : memref<2x32xf32, #tpu.memory_space<vmem>>, vector<2x32xf32>
    tpu.vector_store %arg9[%c0_154, %c0_155], %350 {strides = array<i32>} : memref<2x32xf32, #tpu.memory_space<vmem>>, vector<2x32xf32>,
    return
  }
}

</mosaic_0001>

<llo_original>
// kernel: tpu_custom_call.1
$region0: #{tpu_custom_call.1}
  #allocation0 [shape = 'u32[]', space=smem, size = 0x4, offset = 0x4, fixed_abs, tag = 'smem constant byte address 0x4 - core index']
  #allocation1 [shape = 'u32[144,128]{1,0:T(1,128)}', space=vmem, size = 0x12000, scoped, tag = 'internal scratch']
  %s0 = inlined_call_operand.vmem [shape: s32[2,1], index: 0, kind: input, shape index: {}]
  %s1 = inlined_call_operand.hbm [shape: f32[8,2,32], index: 1, kind: input, shape index: {}]
  %s2 = inlined_call_operand.hbm [shape: f32[8,2,32], index: 2, kind: input, shape index: {}]
  %s3 = inlined_call_operand.hbm [shape: f32[8,2,32], index: 3, kind: input, shape index: {}]
  %s4 = inlined_call_operand.vmem [shape: bf16[32,32], index: 4, kind: input, shape index: {}]
  %s5 = inlined_call_operand.hbm [shape: bf16[32,32], index: 5, kind: input, shape index: {}]
  %s6 = inlined_call_operand.hbm [shape: bf16[32,32], index: 6, kind: input, shape index: {}]
  %s7 = inlined_call_operand.vmem [shape: f32[1,32], index: 7, kind: input, shape index: {}]
  %s8 = inlined_call_operand.hbm [shape: f32[8,2,32], index: 8, kind: output, shape index: {0}]
  %s9 = inlined_call_operand.hbm [shape: f32[2,32], index: 9, kind: output, shape index: {1}]
  %10 = xla_tuple %s8, %s9
  %s11 = sld [smem:[#allocation0]]
  $region70: #{tpu_custom_call.1} parent=0
    _
  %s13 = ssub.s32 1, %s11
  %s14 = scalar_select 0, %s13, %s11
  $region1: #{tpu_custom_call.1} parent=0
    #allocation2 [shape = 'u8[8192]{0}', space=vmem, size = 0x2000, scoped, tag = 'input window, operand 1, single buffered']
    #allocation3 [shape = 's32[1]{0}', space=sflag, size = 0x4, scoped, tag = 'scoped memory for tpu_custom_call.1']
    #allocation4 [shape = 's32[1]{0}', space=sflag, size = 0x4, scoped, tag = 'scoped memory for tpu_custom_call.1']
    #allocation5 [shape = 'u8[8192]{0}', space=vmem, size = 0x2000, scoped, tag = 'input window, operand 2, single buffered']
    #allocation6 [shape = 's32[1]{0}', space=sflag, size = 0x4, scoped, tag = 'scoped memory for tpu_custom_call.1']
    #allocation7 [shape = 'u8[8192]{0}', space=vmem, size = 0x2000, scoped, tag = 'input window, operand 3, single buffered']
    #allocation8 [shape = 'u8[8192]{0}', space=vmem, size = 0x2000, scoped, tag = 'input window, operand 5, single buffered']
    #allocation9 [shape = 's32[1]{0}', space=sflag, size = 0x4, scoped, tag = 'scoped memory for tpu_custom_call.1']
    #allocation10 [shape = 'u8[8192]{0}', space=vmem, size = 0x2000, scoped, tag = 'input window, operand 6, single buffered']
    #allocation11 [shape = 'u8[8192]{0}', space=vmem, size = 0x2000, scoped, tag = 'output window, operand 0, single buffered']
    #allocation12 [shape = 'u8[1024]{0}', space=vmem, size = 0x400, scoped, tag = 'output window, operand 1, single buffered']
    #allocation13 [shape = 's32[1]{0}', space=sflag, size = 0x4, scoped, tag = 'scoped memory for tpu_custom_call.1']
    %15 = vsyncpa [#allocation3], 0
    %16 = vsyncpa [#allocation6], 0
    %17 = vsyncpa [#allocation9], 0
    %18 = vsyncpa [#allocation4], 0
    %19 = vsyncpa [#allocation13], 0
    // Predicated region
    $region2: #{tpu_custom_call.1} parent=1 // pred_check
      _
    $region3: #{tpu_custom_call.1} parent=1 // pred_check_branch
      %21 = sbr.rel (0) target = $region5
    $region4: #{tpu_custom_call.1} parent=1 // pred_region
      _
    $region5: #{tpu_custom_call.1} parent=1 // pred_fallthru
      _
    // Predicated region
    $region6: #{tpu_custom_call.1} parent=1 // pred_check
      _
    $region7: #{tpu_custom_call.1} parent=1 // pred_check_branch
      %23 = sbr.rel (0) target = $region9
    $region8: #{tpu_custom_call.1} parent=1 // pred_region
      %s25 = ssub.s32 256, 256
      %26 = vsyncadd [#allocation3], %s25
      %s27 = sshll.u32 [#allocation2], 4
      %s28 = int_to_ptr.vmem [resolvable:$true] %s27
      %33 = dma.hbm_to_vmem [thread:$0]  %s1, 256, %s28, [#allocation3], 32, 32, 2
    $region9: #{tpu_custom_call.1} parent=1 // pred_fallthru
      _
    // Predicated region
    $region10: #{tpu_custom_call.1} parent=1 // pred_check
      _
    $region11: #{tpu_custom_call.1} parent=1 // pred_check_branch
      %35 = sbr.rel (0) target = $region13
    $region12: #{tpu_custom_call.1} parent=1 // pred_region
      %s37 = ssub.s32 256, 256
      %38 = vsyncadd [#allocation6], %s37
      %s39 = sshll.u32 [#allocation5], 4
      %s40 = int_to_ptr.vmem [resolvable:$true] %s39
      %45 = dma.hbm_to_vmem [thread:$0]  %s2, 256, %s40, [#allocation6], 32, 32, 2
    $region13: #{tpu_custom_call.1} parent=1 // pred_fallthru
      _
    // Predicated region
    $region14: #{tpu_custom_call.1} parent=1 // pred_check
      _
    $region15: #{tpu_custom_call.1} parent=1 // pred_check_branch
      %47 = sbr.rel (0) target = $region17
    $region16: #{tpu_custom_call.1} parent=1 // pred_region
      %s49 = ssub.s32 256, 256
      %50 = vsyncadd [#allocation6], %s49
      %s51 = sshll.u32 [#allocation7], 4
      %s52 = int_to_ptr.vmem [resolvable:$true] %s51
      %57 = dma.hbm_to_vmem [thread:$0]  %s3, 256, %s52, [#allocation6], 32, 32, 2
    $region17: #{tpu_custom_call.1} parent=1 // pred_fallthru
      _
    // Predicated region
    $region18: #{tpu_custom_call.1} parent=1 // pred_check
      _
    $region19: #{tpu_custom_call.1} parent=1 // pred_check_branch
      %59 = sbr.rel (0) target = $region21
    $region20: #{tpu_custom_call.1} parent=1 // pred_region
      _
    $region21: #{tpu_custom_call.1} parent=1 // pred_fallthru
      _
    // Predicated region
    $region22: #{tpu_custom_call.1} parent=1 // pred_check
      _
    $region23: #{tpu_custom_call.1} parent=1 // pred_check_branch
      %61 = sbr.rel (0) target = $region25
    $region24: #{tpu_custom_call.1} parent=1 // pred_region
      %s63 = ssub.s32 256, 256
      %64 = vsyncadd [#allocation9], %s63
      %s65 = sshll.u32 [#allocation8], 4
      %s66 = int_to_ptr.vmem [resolvable:$true] %s65
      %71 = dma.hbm_to_vmem [thread:$0]  %s5, 256, %s66, [#allocation9], 64, 64, 4
    $region25: #{tpu_custom_call.1} parent=1 // pred_fallthru
      _
    // Predicated region
    $region26: #{tpu_custom_call.1} parent=1 // pred_check
      _
    $region27: #{tpu_custom_call.1} parent=1 // pred_check_branch
      %73 = sbr.rel (0) target = $region29
    $region28: #{tpu_custom_call.1} parent=1 // pred_region
      %s75 = ssub.s32 256, 256
      %76 = vsyncadd [#allocation9], %s75
      %s77 = sshll.u32 [#allocation10], 4
      %s78 = int_to_ptr.vmem [resolvable:$true] %s77
      %83 = dma.hbm_to_vmem [thread:$0]  %s6, 256, %s78, [#allocation9], 64, 64, 4
    $region29: #{tpu_custom_call.1} parent=1 // pred_fallthru
      _
    // Predicated region
    $region30: #{tpu_custom_call.1} parent=1 // pred_check
      _
    $region31: #{tpu_custom_call.1} parent=1 // pred_check_branch
      %85 = sbr.rel (0) target = $region33
    $region32: #{tpu_custom_call.1} parent=1 // pred_region
      _
    $region33: #{tpu_custom_call.1} parent=1 // pred_fallthru
      _
    // Predicated region
    $region34: #{tpu_custom_call.1} parent=1 // pred_check
      _
    $region35: #{tpu_custom_call.1} parent=1 // pred_check_branch
      %87 = sbr.rel (0) target = $region37
    $region36: #{tpu_custom_call.1} parent=1 // pred_region
      %88 = dma.done [#allocation3], 256
    $region37: #{tpu_custom_call.1} parent=1 // pred_fallthru
      _
    // Predicated region
    $region38: #{tpu_custom_call.1} parent=1 // pred_check
      _
    $region39: #{tpu_custom_call.1} parent=1 // pred_check_branch
      %90 = sbr.rel (0) target = $region41
    $region40: #{tpu_custom_call.1} parent=1 // pred_region
      %91 = dma.done [#allocation6], 256
    $region41: #{tpu_custom_call.1} parent=1 // pred_fallthru
      _
    // Predicated region
    $region42: #{tpu_custom_call.1} parent=1 // pred_check
      _
    $region43: #{tpu_custom_call.1} parent=1 // pred_check_branch
      %93 = sbr.rel (0) target = $region45
    $region44: #{tpu_custom_call.1} parent=1 // pred_region
      %94 = dma.done [#allocation6], 256
    $region45: #{tpu_custom_call.1} parent=1 // pred_fallthru
      _
    // Predicated region
    $region46: #{tpu_custom_call.1} parent=1 // pred_check
      _
    $region47: #{tpu_custom_call.1} parent=1 // pred_check_branch
      %96 = sbr.rel (0) target = $region49
    $region48: #{tpu_custom_call.1} parent=1 // pred_region
      %97 = dma.done [#allocation9], 256
    $region49: #{tpu_custom_call.1} parent=1 // pred_fallthru
      _
    // Predicated region
    $region50: #{tpu_custom_call.1} parent=1 // pred_check
      _
    $region51: #{tpu_custom_call.1} parent=1 // pred_check_branch
      %99 = sbr.rel (0) target = $region53
    $region52: #{tpu_custom_call.1} parent=1 // pred_region
      %100 = dma.done [#allocation9], 256
    $region53: #{tpu_custom_call.1} parent=1 // pred_fallthru
      _
    %v102 = vld [vmem:[%s0] sm:$0x3]
    %v103 = vld [vmem:[%s4] sm:$0xf]
    %v104 = vld [vmem:[%s4 + $0x4] sm:$0xf]
    %v105 = vld [vmem:[%s4 + $0x8] sm:$0xf]
    %v106 = vld [vmem:[%s4 + $0xc] sm:$0xf]
    %v107 = vld [vmem:[#allocation8] sm:$0xf]
    %v108 = vld [vmem:[#allocation8 + $0x4] sm:$0xf]
    %v109 = vld [vmem:[#allocation8 + $0x8] sm:$0xf]
    %v110 = vld [vmem:[#allocation8 + $0xc] sm:$0xf]
    %v111 = vld [vmem:[#allocation10] sm:$0xf]
    %v112 = vld [vmem:[#allocation10 + $0x4] sm:$0xf]
    %v113 = vld [vmem:[#allocation10 + $0x8] sm:$0xf]
    %v114 = vld [vmem:[#allocation10 + $0xc] sm:$0xf]
    %v115 = vld [vmem:[%s7] sm:$0x1]
    %v116 = vld [vmem:[#allocation2] sm:$0x3]
    %v121 = vunpack.c.l.b16 %v103
    %v122 = vunpack.c.l.b16 %v104
    %v123 = vunpack.c.l.b16 %v105
    %v124 = vunpack.c.l.b16 %v106
    %v125 = vpack.c.b16 %v122, %v121
    %v126 = vpack.c.b16 %v124, %v123
    %vm129 = vcmask 261120
    %v131 = vsel %vm129, 0, 0
    %133 = vmatprep.subr.bf16.mxu0 0
    %134 = vmatpush1.bf16.msra.mxu0 %v125
    %135 = vmatprep.subr.bf16.mxu0 0
    %136 = vmatpush1.bf16.msra.mxu0 %v126
    %137 = vmatprep.subr.bf16.mxu0 0
    %138 = vmatpush1.bf16.msra.mxu0 0
    %139 = vmatprep.subr.bf16.mxu0 0
    %140 = vmatpush1.bf16.msra.mxu0 0
    %141 = vmatprep.subr.bf16.mxu0 0
    %142 = vmatpush1.bf16.msra.mxu0 0
    %143 = vmatprep.subr.bf16.mxu0 0
    %144 = vmatpush1.bf16.msra.mxu0 0
    %145 = vmatprep.subr.bf16.mxu0 0
    %146 = vmatpush1.bf16.msra.mxu0 0
    %147 = vmatprep.subr.bf16.mxu0 0
    %148 = vmatpush1.bf16.msra.mxu0 0
    %149 = vmatprep.subr.bf16.mxu0 0
    %150 = vmatpush1.bf16.msra.mxu0 0
    %151 = vmatprep.subr.bf16.mxu0 0
    %152 = vmatpush1.bf16.msra.mxu0 0
    %153 = vmatprep.subr.bf16.mxu0 0
    %154 = vmatpush1.bf16.msra.mxu0 0
    %155 = vmatprep.subr.bf16.mxu0 0
    %156 = vmatpush1.bf16.msra.mxu0 0
    %157 = vmatprep.subr.bf16.mxu0 0
    %158 = vmatpush1.bf16.msra.mxu0 0
    %159 = vmatprep.subr.bf16.mxu0 0
    %160 = vmatpush1.bf16.msra.mxu0 0
    %161 = vmatprep.subr.bf16.mxu0 0
    %162 = vmatpush1.bf16.msra.mxu0 0
    %163 = vmatprep.subr.bf16.mxu0 0
    %164 = vmatpush1.bf16.msra.mxu0 0
    %165 = vmatprep.mubr.bf16.mxu0 0
    %166 = vmatmul.mubr.bf16.gmra.mrb[0].mxu0 %v131
    %v167 = vpop.f32.mrb[0].mxu0
    %v168 = vadd.f32 0.0, %v167
    %v169 = vpop.f32.mrb[0].mxu0
    %v170 = vpop.f32.mrb[0].mxu0
    %v171 = vpop.f32.mrb[0].mxu0
    %172 = vdwg.mxu0
    %v173 = vadd.f32 %v116, %v168
    %v174 = vxor.u32 %v173, 2147483648
    %v175 = vmul.f32 %v174, 1.442695
    %v176 = vpow.pop %v175
    %v177 = vadd.f32 %v176, 1.0
    %v178 = vrcp.pop %v177
    %v179 = vmul.f32 1.0, %v178
    %v180 = vld [vmem:[#allocation5] sm:$0x3]
    %v185 = vunpack.c.l.b16 %v107
    %v186 = vunpack.c.l.b16 %v108
    %v187 = vunpack.c.l.b16 %v109
    %v188 = vunpack.c.l.b16 %v110
    %v189 = vpack.c.b16 %v186, %v185
    %v190 = vpack.c.b16 %v188, %v187
    %193 = vmatprep.subr.bf16.mxu0 0
    %194 = vmatpush1.bf16.msra.mxu0 %v189
    %195 = vmatprep.subr.bf16.mxu0 0
    %196 = vmatpush1.bf16.msra.mxu0 %v190
    %197 = vmatprep.subr.bf16.mxu0 0
    %198 = vmatpush1.bf16.msra.mxu0 0
    %199 = vmatprep.subr.bf16.mxu0 0
    %200 = vmatpush1.bf16.msra.mxu0 0
    %201 = vmatprep.subr.bf16.mxu0 0
    %202 = vmatpush1.bf16.msra.mxu0 0
    %203 = vmatprep.subr.bf16.mxu0 0
    %204 = vmatpush1.bf16.msra.mxu0 0
    %205 = vmatprep.subr.bf16.mxu0 0
    %206 = vmatpush1.bf16.msra.mxu0 0
    %207 = vmatprep.subr.bf16.mxu0 0
    %208 = vmatpush1.bf16.msra.mxu0 0
    %209 = vmatprep.subr.bf16.mxu0 0
    %210 = vmatpush1.bf16.msra.mxu0 0
    %211 = vmatprep.subr.bf16.mxu0 0
    %212 = vmatpush1.bf16.msra.mxu0 0
    %213 = vmatprep.subr.bf16.mxu0 0
    %214 = vmatpush1.bf16.msra.mxu0 0
    %215 = vmatprep.subr.bf16.mxu0 0
    %216 = vmatpush1.bf16.msra.mxu0 0
    %217 = vmatprep.subr.bf16.mxu0 0
    %218 = vmatpush1.bf16.msra.mxu0 0
    %219 = vmatprep.subr.bf16.mxu0 0
    %220 = vmatpush1.bf16.msra.mxu0 0
    %221 = vmatprep.subr.bf16.mxu0 0
    %222 = vmatpush1.bf16.msra.mxu0 0
    %223 = vmatprep.subr.bf16.mxu0 0
    %224 = vmatpush1.bf16.msra.mxu0 0
    %225 = vmatprep.mubr.bf16.mxu0 0
    %226 = vmatmul.mubr.bf16.gmra.mrb[0].mxu0 %v131
    %v227 = vpop.f32.mrb[0].mxu0
    %v228 = vadd.f32 0.0, %v227
    %v229 = vpop.f32.mrb[0].mxu0
    %v230 = vpop.f32.mrb[0].mxu0
    %v231 = vpop.f32.mrb[0].mxu0
    %232 = vdwg.mxu0
    %v233 = vadd.f32 %v180, %v228
    %v234 = vxor.u32 %v233, 2147483648
    %v235 = vmul.f32 %v234, 1.442695
    %v236 = vpow.pop %v235
    %v237 = vadd.f32 %v236, 1.0
    %v238 = vrcp.pop %v237
    %v239 = vmul.f32 1.0, %v238
    %v241 = vlaneseq
    %v242 = vshrl.u32 %v241, 7
    %v243 = vsub.s32 0, %v242
    %v244 = vrot.slane %v115, %v243
    %v250 = vunpack.c.l.b16 %v111
    %v251 = vunpack.c.l.b16 %v112
    %v252 = vunpack.c.l.b16 %v113
    %v253 = vunpack.c.l.b16 %v114
    %v254 = vpack.c.b16 %v251, %v250
    %v255 = vpack.c.b16 %v253, %v252
    %258 = vmatprep.subr.bf16.mxu0 0
    %259 = vmatpush1.bf16.msra.mxu0 %v254
    %260 = vmatprep.subr.bf16.mxu0 0
    %261 = vmatpush1.bf16.msra.mxu0 %v255
    %262 = vmatprep.subr.bf16.mxu0 0
    %263 = vmatpush1.bf16.msra.mxu0 0
    %264 = vmatprep.subr.bf16.mxu0 0
    %265 = vmatpush1.bf16.msra.mxu0 0
    %266 = vmatprep.subr.bf16.mxu0 0
    %267 = vmatpush1.bf16.msra.mxu0 0
    %268 = vmatprep.subr.bf16.mxu0 0
    %269 = vmatpush1.bf16.msra.mxu0 0
    %270 = vmatprep.subr.bf16.mxu0 0
    %271 = vmatpush1.bf16.msra.mxu0 0
    %272 = vmatprep.subr.bf16.mxu0 0
    %273 = vmatpush1.bf16.msra.mxu0 0
    %274 = vmatprep.subr.bf16.mxu0 0
    %275 = vmatpush1.bf16.msra.mxu0 0
    %276 = vmatprep.subr.bf16.mxu0 0
    %277 = vmatpush1.bf16.msra.mxu0 0
    %278 = vmatprep.subr.bf16.mxu0 0
    %279 = vmatpush1.bf16.msra.mxu0 0
    %280 = vmatprep.subr.bf16.mxu0 0
    %281 = vmatpush1.bf16.msra.mxu0 0
    %282 = vmatprep.subr.bf16.mxu0 0
    %283 = vmatpush1.bf16.msra.mxu0 0
    %284 = vmatprep.subr.bf16.mxu0 0
    %285 = vmatpush1.bf16.msra.mxu0 0
    %286 = vmatprep.subr.bf16.mxu0 0
    %287 = vmatpush1.bf16.msra.mxu0 0
    %288 = vmatprep.subr.bf16.mxu0 0
    %289 = vmatpush1.bf16.msra.mxu0 0
    %290 = vmatprep.mubr.bf16.mxu0 0
    %291 = vmatmul.mubr.bf16.gmra.mrb[0].mxu0 %v131
    %v292 = vpop.f32.mrb[0].mxu0
    %v293 = vadd.f32 %v244, %v292
    %v294 = vpop.f32.mrb[0].mxu0
    %v295 = vpop.f32.mrb[0].mxu0
    %v296 = vpop.f32.mrb[0].mxu0
    %297 = vdwg.mxu0
    %v298 = vld [vmem:[#allocation7] sm:$0x3]
    %v299 = vmul.f32 %v179, %v293
    %v300 = vadd.f32 %v298, %v299
    %v301 = vtanh.pop %v300
    %v302 = vsub.f32 1.0, %v239
    %v303 = vmul.f32 %v302, %v301
    %v304 = vmul.f32 %v239, 0.0
    %v305 = vadd.f32 %v303, %v304
    %vm306 = vcmp.gt.s32.totalorder %v102, 0
    %v307 = vsel %vm306, 1, 0
    %308 = vset.pattern.permute.xlu0 0
    %309 = vperm.xlu0 %308, %v307
    %v310 = vpop.permute.xlu0 %309
    %vm311 = vcmp.eq.s32.totalorder %v310, 1
    %v312 = vsel %vm311, %v305, 0.0
    %vm313 = vcmask 254976
    %314 = vst.msk [vmem:[#allocation11] sm:$0x3] %vm313, %v312
    %v315 = vpack.c.bf16 %v312, %v312
    %s316 = scalar_lea.vmem [#allocation2], 2
    %v317 = vld [vmem:[%s316] sm:$0x3]
    %v319 = vsel %vm129, %v315, 0
    %321 = vmatprep.subr.bf16.mxu0 0
    %322 = vmatpush1.bf16.msra.mxu0 %v125
    %323 = vmatprep.subr.bf16.mxu0 0
    %324 = vmatpush1.bf16.msra.mxu0 %v126
    %325 = vmatprep.subr.bf16.mxu0 0
    %326 = vmatpush1.bf16.msra.mxu0 0
    %327 = vmatprep.subr.bf16.mxu0 0
    %328 = vmatpush1.bf16.msra.mxu0 0
    %329 = vmatprep.subr.bf16.mxu0 0
    %330 = vmatpush1.bf16.msra.mxu0 0
    %331 = vmatprep.subr.bf16.mxu0 0
    %332 = vmatpush1.bf16.msra.mxu0 0
    %333 = vmatprep.subr.bf16.mxu0 0
    %334 = vmatpush1.bf16.msra.mxu0 0
    %335 = vmatprep.subr.bf16.mxu0 0
    %336 = vmatpush1.bf16.msra.mxu0 0
    %337 = vmatprep.subr.bf16.mxu0 0
    %338 = vmatpush1.bf16.msra.mxu0 0
    %339 = vmatprep.subr.bf16.mxu0 0
    %340 = vmatpush1.bf16.msra.mxu0 0
    %341 = vmatprep.subr.bf16.mxu0 0
    %342 = vmatpush1.bf16.msra.mxu0 0
    %343 = vmatprep.subr.bf16.mxu0 0
    %344 = vmatpush1.bf16.msra.mxu0 0
    %345 = vmatprep.subr.bf16.mxu0 0
    %346 = vmatpush1.bf16.msra.mxu0 0
    %347 = vmatprep.subr.bf16.mxu0 0
    %348 = vmatpush1.bf16.msra.mxu0 0
    %349 = vmatprep.subr.bf16.mxu0 0
    %350 = vmatpush1.bf16.msra.mxu0 0
    %351 = vmatprep.subr.bf16.mxu0 0
    %352 = vmatpush1.bf16.msra.mxu0 0
    %353 = vmatprep.mubr.bf16.mxu0 0
    %354 = vmatmul.mubr.bf16.gmra.mrb[0].mxu0 %v319
    %v355 = vpop.f32.mrb[0].mxu0
    %v356 = vadd.f32 0.0, %v355
    %v357 = vpop.f32.mrb[0].mxu0
    %v358 = vpop.f32.mrb[0].mxu0
    %v359 = vpop.f32.mrb[0].mxu0
    %360 = vdwg.mxu0
    %v361 = vadd.f32 %v317, %v356
    %v362 = vxor.u32 %v361, 2147483648
    %v363 = vmul.f32 %v362, 1.442695
    %v364 = vpow.pop %v363
    %v365 = vadd.f32 %v364, 1.0
    %v366 = vrcp.pop %v365
    %v367 = vmul.f32 1.0, %v366
    %s368 = scalar_lea.vmem [#allocation5], 2
    %v369 = vld [vmem:[%s368] sm:$0x3]
    %370 = vmatprep.subr.bf16.mxu0 0
    %371 = vmatpush1.bf16.msra.mxu0 %v189
    %372 = vmatprep.subr.bf16.mxu0 0
    %373 = vmatpush1.bf16.msra.mxu0 %v190
    %374 = vmatprep.subr.bf16.mxu0 0
    %375 = vmatpush1.bf16.msra.mxu0 0
    %376 = vmatprep.subr.bf16.mxu0 0
    %377 = vmatpush1.bf16.msra.mxu0 0
    %378 = vmatprep.subr.bf16.mxu0 0
    %379 = vmatpush1.bf16.msra.mxu0 0
    %380 = vmatprep.subr.bf16.mxu0 0
    %381 = vmatpush1.bf16.msra.mxu0 0
    %382 = vmatprep.subr.bf16.mxu0 0
    %383 = vmatpush1.bf16.msra.mxu0 0
    %384 = vmatprep.subr.bf16.mxu0 0
    %385 = vmatpush1.bf16.msra.mxu0 0
    %386 = vmatprep.subr.bf16.mxu0 0
    %387 = vmatpush1.bf16.msra.mxu0 0
    %388 = vmatprep.subr.bf16.mxu0 0
    %389 = vmatpush1.bf16.msra.mxu0 0
    %390 = vmatprep.subr.bf16.mxu0 0
    %391 = vmatpush1.bf16.msra.mxu0 0
    %392 = vmatprep.subr.bf16.mxu0 0
    %393 = vmatpush1.bf16.msra.mxu0 0
    %394 = vmatprep.subr.bf16.mxu0 0
    %395 = vmatpush1.bf16.msra.mxu0 0
    %396 = vmatprep.subr.bf16.mxu0 0
    %397 = vmatpush1.bf16.msra.mxu0 0
    %398 = vmatprep.subr.bf16.mxu0 0
    %399 = vmatpush1.bf16.msra.mxu0 0
    %400 = vmatprep.subr.bf16.mxu0 0
    %401 = vmatpush1.bf16.msra.mxu0 0
    %402 = vmatprep.mubr.bf16.mxu0 0
    %403 = vmatmul.mubr.bf16.gmra.mrb[0].mxu0 %v319
    %v404 = vpop.f32.mrb[0].mxu0
    %v405 = vadd.f32 0.0, %v404
    %v406 = vpop.f32.mrb[0].mxu0
    %v407 = vpop.f32.mrb[0].mxu0
    %v408 = vpop.f32.mrb[0].mxu0
    %409 = vdwg.mxu0
    %v410 = vadd.f32 %v369, %v405
    %v411 = vxor.u32 %v410, 2147483648
    %v412 = vmul.f32 %v411, 1.442695
    %v413 = vpow.pop %v412
    %v414 = vadd.f32 %v413, 1.0
    %v415 = vrcp.pop %v414
    %v416 = vmul.f32 1.0, %v415
    %417 = vmatprep.subr.bf16.mxu0 0
    %418 = vmatpush1.bf16.msra.mxu0 %v254
    %419 = vmatprep.subr.bf16.mxu0 0
    %420 = vmatpush1.bf16.msra.mxu0 %v255
    %421 = vmatprep.subr.bf16.mxu0 0
    %422 = vmatpush1.bf16.msra.mxu0 0
    %423 = vmatprep.subr.bf16.mxu0 0
    %424 = vmatpush1.bf16.msra.mxu0 0
    %425 = vmatprep.subr.bf16.mxu0 0
    %426 = vmatpush1.bf16.msra.mxu0 0
    %427 = vmatprep.subr.bf16.mxu0 0
    %428 = vmatpush1.bf16.msra.mxu0 0
    %429 = vmatprep.subr.bf16.mxu0 0
    %430 = vmatpush1.bf16.msra.mxu0 0
    %431 = vmatprep.subr.bf16.mxu0 0
    %432 = vmatpush1.bf16.msra.mxu0 0
    %433 = vmatprep.subr.bf16.mxu0 0
    %434 = vmatpush1.bf16.msra.mxu0 0
    %435 = vmatprep.subr.bf16.mxu0 0
    %436 = vmatpush1.bf16.msra.mxu0 0
    %437 = vmatprep.subr.bf16.mxu0 0
    %438 = vmatpush1.bf16.msra.mxu0 0
    %439 = vmatprep.subr.bf16.mxu0 0
    %440 = vmatpush1.bf16.msra.mxu0 0
    %441 = vmatprep.subr.bf16.mxu0 0
    %442 = vmatpush1.bf16.msra.mxu0 0
    %443 = vmatprep.subr.bf16.mxu0 0
    %444 = vmatpush1.bf16.msra.mxu0 0
    %445 = vmatprep.subr.bf16.mxu0 0
    %446 = vmatpush1.bf16.msra.mxu0 0
    %447 = vmatprep.subr.bf16.mxu0 0
    %448 = vmatpush1.bf16.msra.mxu0 0
    %449 = vmatprep.mubr.bf16.mxu0 0
    %450 = vmatmul.mubr.bf16.gmra.mrb[0].mxu0 %v319
    %v451 = vpop.f32.mrb[0].mxu0
    %v452 = vadd.f32 %v244, %v451
    %v453 = vpop.f32.mrb[0].mxu0
    %v454 = vpop.f32.mrb[0].mxu0
    %v455 = vpop.f32.mrb[0].mxu0
    %456 = vdwg.mxu0
    %s457 = scalar_lea.vmem [#allocation7], 2
    %v458 = vld [vmem:[%s457] sm:$0x3]
    %v459 = vmul.f32 %v367, %v452
    %v460 = vadd.f32 %v458, %v459
    %v461 = vtanh.pop %v460
    %v462 = vsub.f32 1.0, %v416
    %v463 = vmul.f32 %v462, %v461
    %v464 = vmul.f32 %v416, %v312
    %v465 = vadd.f32 %v463, %v464
    %vm466 = vcmp.gt.s32.totalorder %v102, 1
    %v467 = vsel %vm466, 1, 0
    %468 = vset.pattern.permute.xlu0 0
    %469 = vperm.xlu0 %468, %v467
    %v470 = vpop.permute.xlu0 %469
    %vm471 = vcmp.eq.s32.totalorder %v470, 1
    %v472 = vsel %vm471, %v465, %v312
    %v473 = vsel %vm471, %v465, 0.0
    %s474 = scalar_lea.vmem [#allocation11], 2
    %475 = vst.msk [vmem:[%s474] sm:$0x3] %vm313, %v473
    %v476 = vpack.c.bf16 %v472, %v472
    %s477 = scalar_lea.vmem [#allocation2], 4
    %v478 = vld [vmem:[%s477] sm:$0x3]
    %v480 = vsel %vm129, %v476, 0
    %482 = vmatprep.subr.bf16.mxu0 0
    %483 = vmatpush1.bf16.msra.mxu0 %v125
    %484 = vmatprep.subr.bf16.mxu0 0
    %485 = vmatpush1.bf16.msra.mxu0 %v126
    %486 = vmatprep.subr.bf16.mxu0 0
    %487 = vmatpush1.bf16.msra.mxu0 0
    %488 = vmatprep.subr.bf16.mxu0 0
    %489 = vmatpush1.bf16.msra.mxu0 0
    %490 = vmatprep.subr.bf16.mxu0 0
    %491 = vmatpush1.bf16.msra.mxu0 0
    %492 = vmatprep.subr.bf16.mxu0 0
    %493 = vmatpush1.bf16.msra.mxu0 0
    %494 = vmatprep.subr.bf16.mxu0 0
    %495 = vmatpush1.bf16.msra.mxu0 0
    %496 = vmatprep.subr.bf16.mxu0 0
    %497 = vmatpush1.bf16.msra.mxu0 0
    %498 = vmatprep.subr.bf16.mxu0 0
    %499 = vmatpush1.bf16.msra.mxu0 0
    %500 = vmatprep.subr.bf16.mxu0 0
    %501 = vmatpush1.bf16.msra.mxu0 0
    %502 = vmatprep.subr.bf16.mxu0 0
    %503 = vmatpush1.bf16.msra.mxu0 0
    %504 = vmatprep.subr.bf16.mxu0 0
    %505 = vmatpush1.bf16.msra.mxu0 0
    %506 = vmatprep.subr.bf16.mxu0 0
    %507 = vmatpush1.bf16.msra.mxu0 0
    %508 = vmatprep.subr.bf16.mxu0 0
    %509 = vmatpush1.bf16.msra.mxu0 0
    %510 = vmatprep.subr.bf16.mxu0 0
    %511 = vmatpush1.bf16.msra.mxu0 0
    %512 = vmatprep.subr.bf16.mxu0 0
    %513 = vmatpush1.bf16.msra.mxu0 0
    %514 = vmatprep.mubr.bf16.mxu0 0
    %515 = vmatmul.mubr.bf16.gmra.mrb[0].mxu0 %v480
    %v516 = vpop.f32.mrb[0].mxu0
    %v517 = vadd.f32 0.0, %v516
    %v518 = vpop.f32.mrb[0].mxu0
    %v519 = vpop.f32.mrb[0].mxu0
    %v520 = vpop.f32.mrb[0].mxu0
    %521 = vdwg.mxu0
    %v522 = vadd.f32 %v478, %v517
    %v523 = vxor.u32 %v522, 2147483648
    %v524 = vmul.f32 %v523, 1.442695
    %v525 = vpow.pop %v524
    %v526 = vadd.f32 %v525, 1.0
    %v527 = vrcp.pop %v526
    %v528 = vmul.f32 1.0, %v527
    %s529 = scalar_lea.vmem [#allocation5], 4
    %v530 = vld [vmem:[%s529] sm:$0x3]
    %531 = vmatprep.subr.bf16.mxu0 0
    %532 = vmatpush1.bf16.msra.mxu0 %v189
    %533 = vmatprep.subr.bf16.mxu0 0
    %534 = vmatpush1.bf16.msra.mxu0 %v190
    %535 = vmatprep.subr.bf16.mxu0 0
    %536 = vmatpush1.bf16.msra.mxu0 0
    %537 = vmatprep.subr.bf16.mxu0 0
    %538 = vmatpush1.bf16.msra.mxu0 0
    %539 = vmatprep.subr.bf16.mxu0 0
    %540 = vmatpush1.bf16.msra.mxu0 0
    %541 = vmatprep.subr.bf16.mxu0 0
    %542 = vmatpush1.bf16.msra.mxu0 0
    %543 = vmatprep.subr.bf16.mxu0 0
    %544 = vmatpush1.bf16.msra.mxu0 0
    %545 = vmatprep.subr.bf16.mxu0 0
    %546 = vmatpush1.bf16.msra.mxu0 0
    %547 = vmatprep.subr.bf16.mxu0 0
    %548 = vmatpush1.bf16.msra.mxu0 0
    %549 = vmatprep.subr.bf16.mxu0 0
    %550 = vmatpush1.bf16.msra.mxu0 0
    %551 = vmatprep.subr.bf16.mxu0 0
    %552 = vmatpush1.bf16.msra.mxu0 0
    %553 = vmatprep.subr.bf16.mxu0 0
    %554 = vmatpush1.bf16.msra.mxu0 0
    %555 = vmatprep.subr.bf16.mxu0 0
    %556 = vmatpush1.bf16.msra.mxu0 0
    %557 = vmatprep.subr.bf16.mxu0 0
    %558 = vmatpush1.bf16.msra.mxu0 0
    %559 = vmatprep.subr.bf16.mxu0 0
    %560 = vmatpush1.bf16.msra.mxu0 0
    %561 = vmatprep.subr.bf16.mxu0 0
    %562 = vmatpush1.bf16.msra.mxu0 0
    %563 = vmatprep.mubr.bf16.mxu0 0
    %564 = vmatmul.mubr.bf16.gmra.mrb[0].mxu0 %v480
    %v565 = vpop.f32.mrb[0].mxu0
    %v566 = vadd.f32 0.0, %v565
    %v567 = vpop.f32.mrb[0].mxu0
    %v568 = vpop.f32.mrb[0].mxu0
    %v569 = vpop.f32.mrb[0].mxu0
    %570 = vdwg.mxu0
    %v571 = vadd.f32 %v530, %v566
    %v572 = vxor.u32 %v571, 2147483648
    %v573 = vmul.f32 %v572, 1.442695
    %v574 = vpow.pop %v573
    %v575 = vadd.f32 %v574, 1.0
    %v576 = vrcp.pop %v575
    %v577 = vmul.f32 1.0, %v576
    %578 = vmatprep.subr.bf16.mxu0 0
    %579 = vmatpush1.bf16.msra.mxu0 %v254
    %580 = vmatprep.subr.bf16.mxu0 0
    %581 = vmatpush1.bf16.msra.mxu0 %v255
    %582 = vmatprep.subr.bf16.mxu0 0
    %583 = vmatpush1.bf16.msra.mxu0 0
    %584 = vmatprep.subr.bf16.mxu0 0
    %585 = vmatpush1.bf16.msra.mxu0 0
    %586 = vmatprep.subr.bf16.mxu0 0
    %587 = vmatpush1.bf16.msra.mxu0 0
    %588 = vmatprep.subr.bf16.mxu0 0
    %589 = vmatpush1.bf16.msra.mxu0 0
    %590 = vmatprep.subr.bf16.mxu0 0
    %591 = vmatpush1.bf16.msra.mxu0 0
    %592 = vmatprep.subr.bf16.mxu0 0
    %593 = vmatpush1.bf16.msra.mxu0 0
    %594 = vmatprep.subr.bf16.mxu0 0
    %595 = vmatpush1.bf16.msra.mxu0 0
    %596 = vmatprep.subr.bf16.mxu0 0
    %597 = vmatpush1.bf16.msra.mxu0 0
    %598 = vmatprep.subr.bf16.mxu0 0
    %599 = vmatpush1.bf16.msra.mxu0 0
    %600 = vmatprep.subr.bf16.mxu0 0
    %601 = vmatpush1.bf16.msra.mxu0 0
    %602 = vmatprep.subr.bf16.mxu0 0
    %603 = vmatpush1.bf16.msra.mxu0 0
    %604 = vmatprep.subr.bf16.mxu0 0
    %605 = vmatpush1.bf16.msra.mxu0 0
    %606 = vmatprep.subr.bf16.mxu0 0
    %607 = vmatpush1.bf16.msra.mxu0 0
    %608 = vmatprep.subr.bf16.mxu0 0
    %609 = vmatpush1.bf16.msra.mxu0 0
    %610 = vmatprep.mubr.bf16.mxu0 0
    %611 = vmatmul.mubr.bf16.gmra.mrb[0].mxu0 %v480
    %v612 = vpop.f32.mrb[0].mxu0
    %v613 = vadd.f32 %v244, %v612
    %v614 = vpop.f32.mrb[0].mxu0
    %v615 = vpop.f32.mrb[0].mxu0
    %v616 = vpop.f32.mrb[0].mxu0
    %617 = vdwg.mxu0
    %s618 = scalar_lea.vmem [#allocation7], 4
    %v619 = vld [vmem:[%s618] sm:$0x3]
    %v620 = vmul.f32 %v528, %v613
    %v621 = vadd.f32 %v619, %v620
    %v622 = vtanh.pop %v621
    %v623 = vsub.f32 1.0, %v577
    %v624 = vmul.f32 %v623, %v622
    %v625 = vmul.f32 %v577, %v472
    %v626 = vadd.f32 %v624, %v625
    %vm627 = vcmp.gt.s32.totalorder %v102, 2
    %v628 = vsel %vm627, 1, 0
    %629 = vset.pattern.permute.xlu0 0
    %630 = vperm.xlu0 %629, %v628
    %v631 = vpop.permute.xlu0 %630
    %vm632 = vcmp.eq.s32.totalorder %v631, 1
    %v633 = vsel %vm632, %v626, %v472
    %v634 = vsel %vm632, %v626, 0.0
    %s635 = scalar_lea.vmem [#allocation11], 4
    %636 = vst.msk [vmem:[%s635] sm:$0x3] %vm313, %v634
    %v637 = vpack.c.bf16 %v633, %v633
    %s638 = scalar_lea.vmem [#allocation2], 6
    %v639 = vld [vmem:[%s638] sm:$0x3]
    %v641 = vsel %vm129, %v637, 0
    %643 = vmatprep.subr.bf16.mxu0 0
    %644 = vmatpush1.bf16.msra.mxu0 %v125
    %645 = vmatprep.subr.bf16.mxu0 0
    %646 = vmatpush1.bf16.msra.mxu0 %v126
    %647 = vmatprep.subr.bf16.mxu0 0
    %648 = vmatpush1.bf16.msra.mxu0 0
    %649 = vmatprep.subr.bf16.mxu0 0
    %650 = vmatpush1.bf16.msra.mxu0 0
    %651 = vmatprep.subr.bf16.mxu0 0
    %652 = vmatpush1.bf16.msra.mxu0 0
    %653 = vmatprep.subr.bf16.mxu0 0
    %654 = vmatpush1.bf16.msra.mxu0 0
    %655 = vmatprep.subr.bf16.mxu0 0
    %656 = vmatpush1.bf16.msra.mxu0 0
    %657 = vmatprep.subr.bf16.mxu0 0
    %658 = vmatpush1.bf16.msra.mxu0 0
    %659 = vmatprep.subr.bf16.mxu0 0
    %660 = vmatpush1.bf16.msra.mxu0 0
    %661 = vmatprep.subr.bf16.mxu0 0
    %662 = vmatpush1.bf16.msra.mxu0 0
    %663 = vmatprep.subr.bf16.mxu0 0
    %664 = vmatpush1.bf16.msra.mxu0 0
    %665 = vmatprep.subr.bf16.mxu0 0
    %666 = vmatpush1.bf16.msra.mxu0 0
    %667 = vmatprep.subr.bf16.mxu0 0
    %668 = vmatpush1.bf16.msra.mxu0 0
    %669 = vmatprep.subr.bf16.mxu0 0
    %670 = vmatpush1.bf16.msra.mxu0 0
    %671 = vmatprep.subr.bf16.mxu0 0
    %672 = vmatpush1.bf16.msra.mxu0 0
    %673 = vmatprep.subr.bf16.mxu0 0
    %674 = vmatpush1.bf16.msra.mxu0 0
    %675 = vmatprep.mubr.bf16.mxu0 0
    %676 = vmatmul.mubr.bf16.gmra.mrb[0].mxu0 %v641
    %v677 = vpop.f32.mrb[0].mxu0
    %v678 = vadd.f32 0.0, %v677
    %v679 = vpop.f32.mrb[0].mxu0
    %v680 = vpop.f32.mrb[0].mxu0
    %v681 = vpop.f32.mrb[0].mxu0
    %682 = vdwg.mxu0
    %v683 = vadd.f32 %v639, %v678
    %v684 = vxor.u32 %v683, 2147483648
    %v685 = vmul.f32 %v684, 1.442695
    %v686 = vpow.pop %v685
    %v687 = vadd.f32 %v686, 1.0
    %v688 = vrcp.pop %v687
    %v689 = vmul.f32 1.0, %v688
    %s690 = scalar_lea.vmem [#allocation5], 6
    %v691 = vld [vmem:[%s690] sm:$0x3]
    %692 = vmatprep.subr.bf16.mxu0 0
    %693 = vmatpush1.bf16.msra.mxu0 %v189
    %694 = vmatprep.subr.bf16.mxu0 0
    %695 = vmatpush1.bf16.msra.mxu0 %v190
    %696 = vmatprep.subr.bf16.mxu0 0
    %697 = vmatpush1.bf16.msra.mxu0 0
    %698 = vmatprep.subr.bf16.mxu0 0
    %699 = vmatpush1.bf16.msra.mxu0 0
    %700 = vmatprep.subr.bf16.mxu0 0
    %701 = vmatpush1.bf16.msra.mxu0 0
    %702 = vmatprep.subr.bf16.mxu0 0
    %703 = vmatpush1.bf16.msra.mxu0 0
    %704 = vmatprep.subr.bf16.mxu0 0
    %705 = vmatpush1.bf16.msra.mxu0 0
    %706 = vmatprep.subr.bf16.mxu0 0
    %707 = vmatpush1.bf16.msra.mxu0 0
    %708 = vmatprep.subr.bf16.mxu0 0
    %709 = vmatpush1.bf16.msra.mxu0 0
    %710 = vmatprep.subr.bf16.mxu0 0
    %711 = vmatpush1.bf16.msra.mxu0 0
    %712 = vmatprep.subr.bf16.mxu0 0
    %713 = vmatpush1.bf16.msra.mxu0 0
    %714 = vmatprep.subr.bf16.mxu0 0
    %715 = vmatpush1.bf16.msra.mxu0 0
    %716 = vmatprep.subr.bf16.mxu0 0
    %717 = vmatpush1.bf16.msra.mxu0 0
    %718 = vmatprep.subr.bf16.mxu0 0
    %719 = vmatpush1.bf16.msra.mxu0 0
    %720 = vmatprep.subr.bf16.mxu0 0
    %721 = vmatpush1.bf16.msra.mxu0 0
    %722 = vmatprep.subr.bf16.mxu0 0
    %723 = vmatpush1.bf16.msra.mxu0 0
    %724 = vmatprep.mubr.bf16.mxu0 0
    %725 = vmatmul.mubr.bf16.gmra.mrb[0].mxu0 %v641
    %v726 = vpop.f32.mrb[0].mxu0
    %v727 = vadd.f32 0.0, %v726
    %v728 = vpop.f32.mrb[0].mxu0
    %v729 = vpop.f32.mrb[0].mxu0
    %v730 = vpop.f32.mrb[0].mxu0
    %731 = vdwg.mxu0
    %v732 = vadd.f32 %v691, %v727
    %v733 = vxor.u32 %v732, 2147483648
    %v734 = vmul.f32 %v733, 1.442695
    %v735 = vpow.pop %v734
    %v736 = vadd.f32 %v735, 1.0
    %v737 = vrcp.pop %v736
    %v738 = vmul.f32 1.0, %v737
    %739 = vmatprep.subr.bf16.mxu0 0
    %740 = vmatpush1.bf16.msra.mxu0 %v254
    %741 = vmatprep.subr.bf16.mxu0 0
    %742 = vmatpush1.bf16.msra.mxu0 %v255
    %743 = vmatprep.subr.bf16.mxu0 0
    %744 = vmatpush1.bf16.msra.mxu0 0
    %745 = vmatprep.subr.bf16.mxu0 0
    %746 = vmatpush1.bf16.msra.mxu0 0
    %747 = vmatprep.subr.bf16.mxu0 0
    %748 = vmatpush1.bf16.msra.mxu0 0
    %749 = vmatprep.subr.bf16.mxu0 0
    %750 = vmatpush1.bf16.msra.mxu0 0
    %751 = vmatprep.subr.bf16.mxu0 0
    %752 = vmatpush1.bf16.msra.mxu0 0
    %753 = vmatprep.subr.bf16.mxu0 0
    %754 = vmatpush1.bf16.msra.mxu0 0
    %755 = vmatprep.subr.bf16.mxu0 0
    %756 = vmatpush1.bf16.msra.mxu0 0
    %757 = vmatprep.subr.bf16.mxu0 0
    %758 = vmatpush1.bf16.msra.mxu0 0
    %759 = vmatprep.subr.bf16.mxu0 0
    %760 = vmatpush1.bf16.msra.mxu0 0
    %761 = vmatprep.subr.bf16.mxu0 0
    %762 = vmatpush1.bf16.msra.mxu0 0
    %763 = vmatprep.subr.bf16.mxu0 0
    %764 = vmatpush1.bf16.msra.mxu0 0
    %765 = vmatprep.subr.bf16.mxu0 0
    %766 = vmatpush1.bf16.msra.mxu0 0
    %767 = vmatprep.subr.bf16.mxu0 0
    %768 = vmatpush1.bf16.msra.mxu0 0
    %769 = vmatprep.subr.bf16.mxu0 0
    %770 = vmatpush1.bf16.msra.mxu0 0
    %771 = vmatprep.mubr.bf16.mxu0 0
    %772 = vmatmul.mubr.bf16.gmra.mrb[0].mxu0 %v641
    %v773 = vpop.f32.mrb[0].mxu0
    %v774 = vadd.f32 %v244, %v773
    %v775 = vpop.f32.mrb[0].mxu0
    %v776 = vpop.f32.mrb[0].mxu0
    %v777 = vpop.f32.mrb[0].mxu0
    %778 = vdwg.mxu0
    %s779 = scalar_lea.vmem [#allocation7], 6
    %v780 = vld [vmem:[%s779] sm:$0x3]
    %v781 = vmul.f32 %v689, %v774
    %v782 = vadd.f32 %v780, %v781
    %v783 = vtanh.pop %v782
    %v784 = vsub.f32 1.0, %v738
    %v785 = vmul.f32 %v784, %v783
    %v786 = vmul.f32 %v738, %v633
    %v787 = vadd.f32 %v785, %v786
    %vm788 = vcmp.gt.s32.totalorder %v102, 3
    %v789 = vsel %vm788, 1, 0
    %790 = vset.pattern.permute.xlu0 0
    %791 = vperm.xlu0 %790, %v789
    %v792 = vpop.permute.xlu0 %791
    %vm793 = vcmp.eq.s32.totalorder %v792, 1
    %v794 = vsel %vm793, %v787, %v633
    %v795 = vsel %vm793, %v787, 0.0
    %s796 = scalar_lea.vmem [#allocation11], 6
    %797 = vst.msk [vmem:[%s796] sm:$0x3] %vm313, %v795
    %v798 = vpack.c.bf16 %v794, %v794
    %s799 = scalar_lea.vmem [#allocation2], 8
    %v800 = vld [vmem:[%s799] sm:$0x3]
    %v802 = vsel %vm129, %v798, 0
    %804 = vmatprep.subr.bf16.mxu0 0
    %805 = vmatpush1.bf16.msra.mxu0 %v125
    %806 = vmatprep.subr.bf16.mxu0 0
    %807 = vmatpush1.bf16.msra.mxu0 %v126
    %808 = vmatprep.subr.bf16.mxu0 0
    %809 = vmatpush1.bf16.msra.mxu0 0
    %810 = vmatprep.subr.bf16.mxu0 0
    %811 = vmatpush1.bf16.msra.mxu0 0
    %812 = vmatprep.subr.bf16.mxu0 0
    %813 = vmatpush1.bf16.msra.mxu0 0
    %814 = vmatprep.subr.bf16.mxu0 0
    %815 = vmatpush1.bf16.msra.mxu0 0
    %816 = vmatprep.subr.bf16.mxu0 0
    %817 = vmatpush1.bf16.msra.mxu0 0
    %818 = vmatprep.subr.bf16.mxu0 0
    %819 = vmatpush1.bf16.msra.mxu0 0
    %820 = vmatprep.subr.bf16.mxu0 0
    %821 = vmatpush1.bf16.msra.mxu0 0
    %822 = vmatprep.subr.bf16.mxu0 0
    %823 = vmatpush1.bf16.msra.mxu0 0
    %824 = vmatprep.subr.bf16.mxu0 0
    %825 = vmatpush1.bf16.msra.mxu0 0
    %826 = vmatprep.subr.bf16.mxu0 0
    %827 = vmatpush1.bf16.msra.mxu0 0
    %828 = vmatprep.subr.bf16.mxu0 0
    %829 = vmatpush1.bf16.msra.mxu0 0
    %830 = vmatprep.subr.bf16.mxu0 0
    %831 = vmatpush1.bf16.msra.mxu0 0
    %832 = vmatprep.subr.bf16.mxu0 0
    %833 = vmatpush1.bf16.msra.mxu0 0
    %834 = vmatprep.subr.bf16.mxu0 0
    %835 = vmatpush1.bf16.msra.mxu0 0
    %836 = vmatprep.mubr.bf16.mxu0 0
    %837 = vmatmul.mubr.bf16.gmra.mrb[0].mxu0 %v802
    %v838 = vpop.f32.mrb[0].mxu0
    %v839 = vadd.f32 0.0, %v838
    %v840 = vpop.f32.mrb[0].mxu0
    %v841 = vpop.f32.mrb[0].mxu0
    %v842 = vpop.f32.mrb[0].mxu0
    %843 = vdwg.mxu0
    %v844 = vadd.f32 %v800, %v839
    %v845 = vxor.u32 %v844, 2147483648
    %v846 = vmul.f32 %v845, 1.442695
    %v847 = vpow.pop %v846
    %v848 = vadd.f32 %v847, 1.0
    %v849 = vrcp.pop %v848
    %v850 = vmul.f32 1.0, %v849
    %s851 = scalar_lea.vmem [#allocation5], 8
    %v852 = vld [vmem:[%s851] sm:$0x3]
    %853 = vmatprep.subr.bf16.mxu0 0
    %854 = vmatpush1.bf16.msra.mxu0 %v189
    %855 = vmatprep.subr.bf16.mxu0 0
    %856 = vmatpush1.bf16.msra.mxu0 %v190
    %857 = vmatprep.subr.bf16.mxu0 0
    %858 = vmatpush1.bf16.msra.mxu0 0
    %859 = vmatprep.subr.bf16.mxu0 0
    %860 = vmatpush1.bf16.msra.mxu0 0
    %861 = vmatprep.subr.bf16.mxu0 0
    %862 = vmatpush1.bf16.msra.mxu0 0
    %863 = vmatprep.subr.bf16.mxu0 0
    %864 = vmatpush1.bf16.msra.mxu0 0
    %865 = vmatprep.subr.bf16.mxu0 0
    %866 = vmatpush1.bf16.msra.mxu0 0
    %867 = vmatprep.subr.bf16.mxu0 0
    %868 = vmatpush1.bf16.msra.mxu0 0
    %869 = vmatprep.subr.bf16.mxu0 0
    %870 = vmatpush1.bf16.msra.mxu0 0
    %871 = vmatprep.subr.bf16.mxu0 0
    %872 = vmatpush1.bf16.msra.mxu0 0
    %873 = vmatprep.subr.bf16.mxu0 0
    %874 = vmatpush1.bf16.msra.mxu0 0
    %875 = vmatprep.subr.bf16.mxu0 0
    %876 = vmatpush1.bf16.msra.mxu0 0
    %877 = vmatprep.subr.bf16.mxu0 0
    %878 = vmatpush1.bf16.msra.mxu0 0
    %879 = vmatprep.subr.bf16.mxu0 0
    %880 = vmatpush1.bf16.msra.mxu0 0
    %881 = vmatprep.subr.bf16.mxu0 0
    %882 = vmatpush1.bf16.msra.mxu0 0
    %883 = vmatprep.subr.bf16.mxu0 0
    %884 = vmatpush1.bf16.msra.mxu0 0
    %885 = vmatprep.mubr.bf16.mxu0 0
    %886 = vmatmul.mubr.bf16.gmra.mrb[0].mxu0 %v802
    %v887 = vpop.f32.mrb[0].mxu0
    %v888 = vadd.f32 0.0, %v887
    %v889 = vpop.f32.mrb[0].mxu0
    %v890 = vpop.f32.mrb[0].mxu0
    %v891 = vpop.f32.mrb[0].mxu0
    %892 = vdwg.mxu0
    %v893 = vadd.f32 %v852, %v888
    %v894 = vxor.u32 %v893, 2147483648
    %v895 = vmul.f32 %v894, 1.442695
    %v896 = vpow.pop %v895
    %v897 = vadd.f32 %v896, 1.0
    %v898 = vrcp.pop %v897
    %v899 = vmul.f32 1.0, %v898
    %900 = vmatprep.subr.bf16.mxu0 0
    %901 = vmatpush1.bf16.msra.mxu0 %v254
    %902 = vmatprep.subr.bf16.mxu0 0
    %903 = vmatpush1.bf16.msra.mxu0 %v255
    %904 = vmatprep.subr.bf16.mxu0 0
    %905 = vmatpush1.bf16.msra.mxu0 0
    %906 = vmatprep.subr.bf16.mxu0 0
    %907 = vmatpush1.bf16.msra.mxu0 0
    %908 = vmatprep.subr.bf16.mxu0 0
    %909 = vmatpush1.bf16.msra.mxu0 0
    %910 = vmatprep.subr.bf16.mxu0 0
    %911 = vmatpush1.bf16.msra.mxu0 0
    %912 = vmatprep.subr.bf16.mxu0 0
    %913 = vmatpush1.bf16.msra.mxu0 0
    %914 = vmatprep.subr.bf16.mxu0 0
    %915 = vmatpush1.bf16.msra.mxu0 0
    %916 = vmatprep.subr.bf16.mxu0 0
    %917 = vmatpush1.bf16.msra.mxu0 0
    %918 = vmatprep.subr.bf16.mxu0 0
    %919 = vmatpush1.bf16.msra.mxu0 0
    %920 = vmatprep.subr.bf16.mxu0 0
    %921 = vmatpush1.bf16.msra.mxu0 0
    %922 = vmatprep.subr.bf16.mxu0 0
    %923 = vmatpush1.bf16.msra.mxu0 0
    %924 = vmatprep.subr.bf16.mxu0 0
    %925 = vmatpush1.bf16.msra.mxu0 0
    %926 = vmatprep.subr.bf16.mxu0 0
    %927 = vmatpush1.bf16.msra.mxu0 0
    %928 = vmatprep.subr.bf16.mxu0 0
    %929 = vmatpush1.bf16.msra.mxu0 0
    %930 = vmatprep.subr.bf16.mxu0 0
    %931 = vmatpush1.bf16.msra.mxu0 0
    %932 = vmatprep.mubr.bf16.mxu0 0
    %933 = vmatmul.mubr.bf16.gmra.mrb[0].mxu0 %v802
    %v934 = vpop.f32.mrb[0].mxu0
    %v935 = vadd.f32 %v244, %v934
    %v936 = vpop.f32.mrb[0].mxu0
    %v937 = vpop.f32.mrb[0].mxu0
    %v938 = vpop.f32.mrb[0].mxu0
    %939 = vdwg.mxu0
    %s940 = scalar_lea.vmem [#allocation7], 8
    %v941 = vld [vmem:[%s940] sm:$0x3]
    %v942 = vmul.f32 %v850, %v935
    %v943 = vadd.f32 %v941, %v942
    %v944 = vtanh.pop %v943
    %v945 = vsub.f32 1.0, %v899
    %v946 = vmul.f32 %v945, %v944
    %v947 = vmul.f32 %v899, %v794
    %v948 = vadd.f32 %v946, %v947
    %vm949 = vcmp.gt.s32.totalorder %v102, 4
    %v950 = vsel %vm949, 1, 0
    %951 = vset.pattern.permute.xlu0 0
    %952 = vperm.xlu0 %951, %v950
    %v953 = vpop.permute.xlu0 %952
    %vm954 = vcmp.eq.s32.totalorder %v953, 1
    %v955 = vsel %vm954, %v948, %v794
    %v956 = vsel %vm954, %v948, 0.0
    %s957 = scalar_lea.vmem [#allocation11], 8
    %958 = vst.msk [vmem:[%s957] sm:$0x3] %vm313, %v956
    %v959 = vpack.c.bf16 %v955, %v955
    %s960 = scalar_lea.vmem [#allocation2], 10
    %v961 = vld [vmem:[%s960] sm:$0x3]
    %v963 = vsel %vm129, %v959, 0
    %965 = vmatprep.subr.bf16.mxu0 0
    %966 = vmatpush1.bf16.msra.mxu0 %v125
    %967 = vmatprep.subr.bf16.mxu0 0
    %968 = vmatpush1.bf16.msra.mxu0 %v126
    %969 = vmatprep.subr.bf16.mxu0 0
    %970 = vmatpush1.bf16.msra.mxu0 0
    %971 = vmatprep.subr.bf16.mxu0 0
    %972 = vmatpush1.bf16.msra.mxu0 0
    %973 = vmatprep.subr.bf16.mxu0 0
    %974 = vmatpush1.bf16.msra.mxu0 0
    %975 = vmatprep.subr.bf16.mxu0 0
    %976 = vmatpush1.bf16.msra.mxu0 0
    %977 = vmatprep.subr.bf16.mxu0 0
    %978 = vmatpush1.bf16.msra.mxu0 0
    %979 = vmatprep.subr.bf16.mxu0 0
    %980 = vmatpush1.bf16.msra.mxu0 0
    %981 = vmatprep.subr.bf16.mxu0 0
    %982 = vmatpush1.bf16.msra.mxu0 0
    %983 = vmatprep.subr.bf16.mxu0 0
    %984 = vmatpush1.bf16.msra.mxu0 0
    %985 = vmatprep.subr.bf16.mxu0 0
    %986 = vmatpush1.bf16.msra.mxu0 0
    %987 = vmatprep.subr.bf16.mxu0 0
    %988 = vmatpush1.bf16.msra.mxu0 0
    %989 = vmatprep.subr.bf16.mxu0 0
    %990 = vmatpush1.bf16.msra.mxu0 0
    %991 = vmatprep.subr.bf16.mxu0 0
    %992 = vmatpush1.bf16.msra.mxu0 0
    %993 = vmatprep.subr.bf16.mxu0 0
    %994 = vmatpush1.bf16.msra.mxu0 0
    %995 = vmatprep.subr.bf16.mxu0 0
    %996 = vmatpush1.bf16.msra.mxu0 0
    %997 = vmatprep.mubr.bf16.mxu0 0
    %998 = vmatmul.mubr.bf16.gmra.mrb[0].mxu0 %v963
    %v999 = vpop.f32.mrb[0].mxu0
    %v1000 = vadd.f32 0.0, %v999
    %v1001 = vpop.f32.mrb[0].mxu0
    %v1002 = vpop.f32.mrb[0].mxu0
    %v1003 = vpop.f32.mrb[0].mxu0
    %1004 = vdwg.mxu0
    %v1005 = vadd.f32 %v961, %v1000
    %v1006 = vxor.u32 %v1005, 2147483648
    %v1007 = vmul.f32 %v1006, 1.442695
    %v1008 = vpow.pop %v1007
    %v1009 = vadd.f32 %v1008, 1.0
    %v1010 = vrcp.pop %v1009
    %v1011 = vmul.f32 1.0, %v1010
    %s1012 = scalar_lea.vmem [#allocation5], 10
    %v1013 = vld [vmem:[%s1012] sm:$0x3]
    %1014 = vmatprep.subr.bf16.mxu0 0
    %1015 = vmatpush1.bf16.msra.mxu0 %v189
    %1016 = vmatprep.subr.bf16.mxu0 0
    %1017 = vmatpush1.bf16.msra.mxu0 %v190
    %1018 = vmatprep.subr.bf16.mxu0 0
    %1019 = vmatpush1.bf16.msra.mxu0 0
    %1020 = vmatprep.subr.bf16.mxu0 0
    %1021 = vmatpush1.bf16.msra.mxu0 0
    %1022 = vmatprep.subr.bf16.mxu0 0
    %1023 = vmatpush1.bf16.msra.mxu0 0
    %1024 = vmatprep.subr.bf16.mxu0 0
    %1025 = vmatpush1.bf16.msra.mxu0 0
    %1026 = vmatprep.subr.bf16.mxu0 0
    %1027 = vmatpush1.bf16.msra.mxu0 0
    %1028 = vmatprep.subr.bf16.mxu0 0
    %1029 = vmatpush1.bf16.msra.mxu0 0
    %1030 = vmatprep.subr.bf16.mxu0 0
    %1031 = vmatpush1.bf16.msra.mxu0 0
    %1032 = vmatprep.subr.bf16.mxu0 0
    %1033 = vmatpush1.bf16.msra.mxu0 0
    %1034 = vmatprep.subr.bf16.mxu0 0
    %1035 = vmatpush1.bf16.msra.mxu0 0
    %1036 = vmatprep.subr.bf16.mxu0 0
    %1037 = vmatpush1.bf16.msra.mxu0 0
    %1038 = vmatprep.subr.bf16.mxu0 0
    %1039 = vmatpush1.bf16.msra.mxu0 0
    %1040 = vmatprep.subr.bf16.mxu0 0
    %1041 = vmatpush1.bf16.msra.mxu0 0
    %1042 = vmatprep.subr.bf16.mxu0 0
    %1043 = vmatpush1.bf16.msra.mxu0 0
    %1044 = vmatprep.subr.bf16.mxu0 0
    %1045 = vmatpush1.bf16.msra.mxu0 0
    %1046 = vmatprep.mubr.bf16.mxu0 0
    %1047 = vmatmul.mubr.bf16.gmra.mrb[0].mxu0 %v963
    %v1048 = vpop.f32.mrb[0].mxu0
    %v1049 = vadd.f32 0.0, %v1048
    %v1050 = vpop.f32.mrb[0].mxu0
    %v1051 = vpop.f32.mrb[0].mxu0
    %v1052 = vpop.f32.mrb[0].mxu0
    %1053 = vdwg.mxu0
    %v1054 = vadd.f32 %v1013, %v1049
    %v1055 = vxor.u32 %v1054, 2147483648
    %v1056 = vmul.f32 %v1055, 1.442695
    %v1057 = vpow.pop %v1056
    %v1058 = vadd.f32 %v1057, 1.0
    %v1059 = vrcp.pop %v1058
    %v1060 = vmul.f32 1.0, %v1059
    %1061 = vmatprep.subr.bf16.mxu0 0
    %1062 = vmatpush1.bf16.msra.mxu0 %v254
    %1063 = vmatprep.subr.bf16.mxu0 0
    %1064 = vmatpush1.bf16.msra.mxu0 %v255
    %1065 = vmatprep.subr.bf16.mxu0 0
    %1066 = vmatpush1.bf16.msra.mxu0 0
    %1067 = vmatprep.subr.bf16.mxu0 0
    %1068 = vmatpush1.bf16.msra.mxu0 0
    %1069 = vmatprep.subr.bf16.mxu0 0
    %1070 = vmatpush1.bf16.msra.mxu0 0
    %1071 = vmatprep.subr.bf16.mxu0 0
    %1072 = vmatpush1.bf16.msra.mxu0 0
    %1073 = vmatprep.subr.bf16.mxu0 0
    %1074 = vmatpush1.bf16.msra.mxu0 0
    %1075 = vmatprep.subr.bf16.mxu0 0
    %1076 = vmatpush1.bf16.msra.mxu0 0
    %1077 = vmatprep.subr.bf16.mxu0 0
    %1078 = vmatpush1.bf16.msra.mxu0 0
    %1079 = vmatprep.subr.bf16.mxu0 0
    %1080 = vmatpush1.bf16.msra.mxu0 0
    %1081 = vmatprep.subr.bf16.mxu0 0
    %1082 = vmatpush1.bf16.msra.mxu0 0
    %1083 = vmatprep.subr.bf16.mxu0 0
    %1084 = vmatpush1.bf16.msra.mxu0 0
    %1085 = vmatprep.subr.bf16.mxu0 0
    %1086 = vmatpush1.bf16.msra.mxu0 0
    %1087 = vmatprep.subr.bf16.mxu0 0
    %1088 = vmatpush1.bf16.msra.mxu0 0
    %1089 = vmatprep.subr.bf16.mxu0 0
    %1090 = vmatpush1.bf16.msra.mxu0 0
    %1091 = vmatprep.subr.bf16.mxu0 0
    %1092 = vmatpush1.bf16.msra.mxu0 0
    %1093 = vmatprep.mubr.bf16.mxu0 0
    %1094 = vmatmul.mubr.bf16.gmra.mrb[0].mxu0 %v963
    %v1095 = vpop.f32.mrb[0].mxu0
    %v1096 = vadd.f32 %v244, %v1095
    %v1097 = vpop.f32.mrb[0].mxu0
    %v1098 = vpop.f32.mrb[0].mxu0
    %v1099 = vpop.f32.mrb[0].mxu0
    %1100 = vdwg.mxu0
    %s1101 = scalar_lea.vmem [#allocation7], 10
    %v1102 = vld [vmem:[%s1101] sm:$0x3]
    %v1103 = vmul.f32 %v1011, %v1096
    %v1104 = vadd.f32 %v1102, %v1103
    %v1105 = vtanh.pop %v1104
    %v1106 = vsub.f32 1.0, %v1060
    %v1107 = vmul.f32 %v1106, %v1105
    %v1108 = vmul.f32 %v1060, %v955
    %v1109 = vadd.f32 %v1107, %v1108
    %vm1110 = vcmp.gt.s32.totalorder %v102, 5
    %v1111 = vsel %vm1110, 1, 0
    %1112 = vset.pattern.permute.xlu0 0
    %1113 = vperm.xlu0 %1112, %v1111
    %v1114 = vpop.permute.xlu0 %1113
    %vm1115 = vcmp.eq.s32.totalorder %v1114, 1
    %v1116 = vsel %vm1115, %v1109, %v955
    %v1117 = vsel %vm1115, %v1109, 0.0
    %s1118 = scalar_lea.vmem [#allocation11], 10
    %1119 = vst.msk [vmem:[%s1118] sm:$0x3] %vm313, %v1117
    %v1120 = vpack.c.bf16 %v1116, %v1116
    %s1121 = scalar_lea.vmem [#allocation2], 12
    %v1122 = vld [vmem:[%s1121] sm:$0x3]
    %v1124 = vsel %vm129, %v1120, 0
    %1126 = vmatprep.subr.bf16.mxu0 0
    %1127 = vmatpush1.bf16.msra.mxu0 %v125
    %1128 = vmatprep.subr.bf16.mxu0 0
    %1129 = vmatpush1.bf16.msra.mxu0 %v126
    %1130 = vmatprep.subr.bf16.mxu0 0
    %1131 = vmatpush1.bf16.msra.mxu0 0
    %1132 = vmatprep.subr.bf16.mxu0 0
    %1133 = vmatpush1.bf16.msra.mxu0 0
    %1134 = vmatprep.subr.bf16.mxu0 0
    %1135 = vmatpush1.bf16.msra.mxu0 0
    %1136 = vmatprep.subr.bf16.mxu0 0
    %1137 = vmatpush1.bf16.msra.mxu0 0
    %1138 = vmatprep.subr.bf16.mxu0 0
    %1139 = vmatpush1.bf16.msra.mxu0 0
    %1140 = vmatprep.subr.bf16.mxu0 0
    %1141 = vmatpush1.bf16.msra.mxu0 0
    %1142 = vmatprep.subr.bf16.mxu0 0
    %1143 = vmatpush1.bf16.msra.mxu0 0
    %1144 = vmatprep.subr.bf16.mxu0 0
    %1145 = vmatpush1.bf16.msra.mxu0 0
    %1146 = vmatprep.subr.bf16.mxu0 0
    %1147 = vmatpush1.bf16.msra.mxu0 0
    %1148 = vmatprep.subr.bf16.mxu0 0
    %1149 = vmatpush1.bf16.msra.mxu0 0
    %1150 = vmatprep.subr.bf16.mxu0 0
    %1151 = vmatpush1.bf16.msra.mxu0 0
    %1152 = vmatprep.subr.bf16.mxu0 0
    %1153 = vmatpush1.bf16.msra.mxu0 0
    %1154 = vmatprep.subr.bf16.mxu0 0
    %1155 = vmatpush1.bf16.msra.mxu0 0
    %1156 = vmatprep.subr.bf16.mxu0 0
    %1157 = vmatpush1.bf16.msra.mxu0 0
    %1158 = vmatprep.mubr.bf16.mxu0 0
    %1159 = vmatmul.mubr.bf16.gmra.mrb[0].mxu0 %v1124
    %v1160 = vpop.f32.mrb[0].mxu0
    %v1161 = vadd.f32 0.0, %v1160
    %v1162 = vpop.f32.mrb[0].mxu0
    %v1163 = vpop.f32.mrb[0].mxu0
    %v1164 = vpop.f32.mrb[0].mxu0
    %1165 = vdwg.mxu0
    %v1166 = vadd.f32 %v1122, %v1161
    %v1167 = vxor.u32 %v1166, 2147483648
    %v1168 = vmul.f32 %v1167, 1.442695
    %v1169 = vpow.pop %v1168
    %v1170 = vadd.f32 %v1169, 1.0
    %v1171 = vrcp.pop %v1170
    %v1172 = vmul.f32 1.0, %v1171
    %s1173 = scalar_lea.vmem [#allocation5], 12
    %v1174 = vld [vmem:[%s1173] sm:$0x3]
    %1175 = vmatprep.subr.bf16.mxu0 0
    %1176 = vmatpush1.bf16.msra.mxu0 %v189
    %1177 = vmatprep.subr.bf16.mxu0 0
    %1178 = vmatpush1.bf16.msra.mxu0 %v190
    %1179 = vmatprep.subr.bf16.mxu0 0
    %1180 = vmatpush1.bf16.msra.mxu0 0
    %1181 = vmatprep.subr.bf16.mxu0 0
    %1182 = vmatpush1.bf16.msra.mxu0 0
    %1183 = vmatprep.subr.bf16.mxu0 0
    %1184 = vmatpush1.bf16.msra.mxu0 0
    %1185 = vmatprep.subr.bf16.mxu0 0
    %1186 = vmatpush1.bf16.msra.mxu0 0
    %1187 = vmatprep.subr.bf16.mxu0 0
    %1188 = vmatpush1.bf16.msra.mxu0 0
    %1189 = vmatprep.subr.bf16.mxu0 0
    %1190 = vmatpush1.bf16.msra.mxu0 0
    %1191 = vmatprep.subr.bf16.mxu0 0
    %1192 = vmatpush1.bf16.msra.mxu0 0
    %1193 = vmatprep.subr.bf16.mxu0 0
    %1194 = vmatpush1.bf16.msra.mxu0 0
    %1195 = vmatprep.subr.bf16.mxu0 0
    %1196 = vmatpush1.bf16.msra.mxu0 0
    %1197 = vmatprep.subr.bf16.mxu0 0
    %1198 = vmatpush1.bf16.msra.mxu0 0
    %1199 = vmatprep.subr.bf16.mxu0 0
    %1200 = vmatpush1.bf16.msra.mxu0 0
    %1201 = vmatprep.subr.bf16.mxu0 0
    %1202 = vmatpush1.bf16.msra.mxu0 0
    %1203 = vmatprep.subr.bf16.mxu0 0
    %1204 = vmatpush1.bf16.msra.mxu0 0
    %1205 = vmatprep.subr.bf16.mxu0 0
    %1206 = vmatpush1.bf16.msra.mxu0 0
    %1207 = vmatprep.mubr.bf16.mxu0 0
    %1208 = vmatmul.mubr.bf16.gmra.mrb[0].mxu0 %v1124
    %v1209 = vpop.f32.mrb[0].mxu0
    %v1210 = vadd.f32 0.0, %v1209
    %v1211 = vpop.f32.mrb[0].mxu0
    %v1212 = vpop.f32.mrb[0].mxu0
    %v1213 = vpop.f32.mrb[0].mxu0
    %1214 = vdwg.mxu0
    %v1215 = vadd.f32 %v1174, %v1210
    %v1216 = vxor.u32 %v1215, 2147483648
    %v1217 = vmul.f32 %v1216, 1.442695
    %v1218 = vpow.pop %v1217
    %v1219 = vadd.f32 %v1218, 1.0
    %v1220 = vrcp.pop %v1219
    %v1221 = vmul.f32 1.0, %v1220
    %1222 = vmatprep.subr.bf16.mxu0 0
    %1223 = vmatpush1.bf16.msra.mxu0 %v254
    %1224 = vmatprep.subr.bf16.mxu0 0
    %1225 = vmatpush1.bf16.msra.mxu0 %v255
    %1226 = vmatprep.subr.bf16.mxu0 0
    %1227 = vmatpush1.bf16.msra.mxu0 0
    %1228 = vmatprep.subr.bf16.mxu0 0
    %1229 = vmatpush1.bf16.msra.mxu0 0
    %1230 = vmatprep.subr.bf16.mxu0 0
    %1231 = vmatpush1.bf16.msra.mxu0 0
    %1232 = vmatprep.subr.bf16.mxu0 0
    %1233 = vmatpush1.bf16.msra.mxu0 0
    %1234 = vmatprep.subr.bf16.mxu0 0
    %1235 = vmatpush1.bf16.msra.mxu0 0
    %1236 = vmatprep.subr.bf16.mxu0 0
    %1237 = vmatpush1.bf16.msra.mxu0 0
    %1238 = vmatprep.subr.bf16.mxu0 0
    %1239 = vmatpush1.bf16.msra.mxu0 0
    %1240 = vmatprep.subr.bf16.mxu0 0
    %1241 = vmatpush1.bf16.msra.mxu0 0
    %1242 = vmatprep.subr.bf16.mxu0 0
    %1243 = vmatpush1.bf16.msra.mxu0 0
    %1244 = vmatprep.subr.bf16.mxu0 0
    %1245 = vmatpush1.bf16.msra.mxu0 0
    %1246 = vmatprep.subr.bf16.mxu0 0
    %1247 = vmatpush1.bf16.msra.mxu0 0
    %1248 = vmatprep.subr.bf16.mxu0 0
    %1249 = vmatpush1.bf16.msra.mxu0 0
    %1250 = vmatprep.subr.bf16.mxu0 0
    %1251 = vmatpush1.bf16.msra.mxu0 0
    %1252 = vmatprep.subr.bf16.mxu0 0
    %1253 = vmatpush1.bf16.msra.mxu0 0
    %1254 = vmatprep.mubr.bf16.mxu0 0
    %1255 = vmatmul.mubr.bf16.gmra.mrb[0].mxu0 %v1124
    %v1256 = vpop.f32.mrb[0].mxu0
    %v1257 = vadd.f32 %v244, %v1256
    %v1258 = vpop.f32.mrb[0].mxu0
    %v1259 = vpop.f32.mrb[0].mxu0
    %v1260 = vpop.f32.mrb[0].mxu0
    %1261 = vdwg.mxu0
    %s1262 = scalar_lea.vmem [#allocation7], 12
    %v1263 = vld [vmem:[%s1262] sm:$0x3]
    %v1264 = vmul.f32 %v1172, %v1257
    %v1265 = vadd.f32 %v1263, %v1264
    %v1266 = vtanh.pop %v1265
    %v1267 = vsub.f32 1.0, %v1221
    %v1268 = vmul.f32 %v1267, %v1266
    %v1269 = vmul.f32 %v1221, %v1116
    %v1270 = vadd.f32 %v1268, %v1269
    %vm1271 = vcmp.gt.s32.totalorder %v102, 6
    %v1272 = vsel %vm1271, 1, 0
    %1273 = vset.pattern.permute.xlu0 0
    %1274 = vperm.xlu0 %1273, %v1272
    %v1275 = vpop.permute.xlu0 %1274
    %vm1276 = vcmp.eq.s32.totalorder %v1275, 1
    %v1277 = vsel %vm1276, %v1270, %v1116
    %v1278 = vsel %vm1276, %v1270, 0.0
    %s1279 = scalar_lea.vmem [#allocation11], 12
    %1280 = vst.msk [vmem:[%s1279] sm:$0x3] %vm313, %v1278
    %v1281 = vpack.c.bf16 %v1277, %v1277
    %s1282 = scalar_lea.vmem [#allocation2], 14
    %v1283 = vld [vmem:[%s1282] sm:$0x3]
    %v1285 = vsel %vm129, %v1281, 0
    %1287 = vmatprep.subr.bf16.mxu0 0
    %1288 = vmatpush1.bf16.msra.mxu0 %v125
    %1289 = vmatprep.subr.bf16.mxu0 0
    %1290 = vmatpush1.bf16.msra.mxu0 %v126
    %1291 = vmatprep.subr.bf16.mxu0 0
    %1292 = vmatpush1.bf16.msra.mxu0 0
    %1293 = vmatprep.subr.bf16.mxu0 0
    %1294 = vmatpush1.bf16.msra.mxu0 0
    %1295 = vmatprep.subr.bf16.mxu0 0
    %1296 = vmatpush1.bf16.msra.mxu0 0
    %1297 = vmatprep.subr.bf16.mxu0 0
    %1298 = vmatpush1.bf16.msra.mxu0 0
    %1299 = vmatprep.subr.bf16.mxu0 0
    %1300 = vmatpush1.bf16.msra.mxu0 0
    %1301 = vmatprep.subr.bf16.mxu0 0
    %1302 = vmatpush1.bf16.msra.mxu0 0
    %1303 = vmatprep.subr.bf16.mxu0 0
    %1304 = vmatpush1.bf16.msra.mxu0 0
    %1305 = vmatprep.subr.bf16.mxu0 0
    %1306 = vmatpush1.bf16.msra.mxu0 0
    %1307 = vmatprep.subr.bf16.mxu0 0
    %1308 = vmatpush1.bf16.msra.mxu0 0
    %1309 = vmatprep.subr.bf16.mxu0 0
    %1310 = vmatpush1.bf16.msra.mxu0 0
    %1311 = vmatprep.subr.bf16.mxu0 0
    %1312 = vmatpush1.bf16.msra.mxu0 0
    %1313 = vmatprep.subr.bf16.mxu0 0
    %1314 = vmatpush1.bf16.msra.mxu0 0
    %1315 = vmatprep.subr.bf16.mxu0 0
    %1316 = vmatpush1.bf16.msra.mxu0 0
    %1317 = vmatprep.subr.bf16.mxu0 0
    %1318 = vmatpush1.bf16.msra.mxu0 0
    %1319 = vmatprep.mubr.bf16.mxu0 0
    %1320 = vmatmul.mubr.bf16.gmra.mrb[0].mxu0 %v1285
    %v1321 = vpop.f32.mrb[0].mxu0
    %v1322 = vadd.f32 0.0, %v1321
    %v1323 = vpop.f32.mrb[0].mxu0
    %v1324 = vpop.f32.mrb[0].mxu0
    %v1325 = vpop.f32.mrb[0].mxu0
    %1326 = vdwg.mxu0
    %v1327 = vadd.f32 %v1283, %v1322
    %v1328 = vxor.u32 %v1327, 2147483648
    %v1329 = vmul.f32 %v1328, 1.442695
    %v1330 = vpow.pop %v1329
    %v1331 = vadd.f32 %v1330, 1.0
    %v1332 = vrcp.pop %v1331
    %v1333 = vmul.f32 1.0, %v1332
    %s1334 = scalar_lea.vmem [#allocation5], 14
    %v1335 = vld [vmem:[%s1334] sm:$0x3]
    %1336 = vmatprep.subr.bf16.mxu0 0
    %1337 = vmatpush1.bf16.msra.mxu0 %v189
    %1338 = vmatprep.subr.bf16.mxu0 0
    %1339 = vmatpush1.bf16.msra.mxu0 %v190
    %1340 = vmatprep.subr.bf16.mxu0 0
    %1341 = vmatpush1.bf16.msra.mxu0 0
    %1342 = vmatprep.subr.bf16.mxu0 0
    %1343 = vmatpush1.bf16.msra.mxu0 0
    %1344 = vmatprep.subr.bf16.mxu0 0
    %1345 = vmatpush1.bf16.msra.mxu0 0
    %1346 = vmatprep.subr.bf16.mxu0 0
    %1347 = vmatpush1.bf16.msra.mxu0 0
    %1348 = vmatprep.subr.bf16.mxu0 0
    %1349 = vmatpush1.bf16.msra.mxu0 0
    %1350 = vmatprep.subr.bf16.mxu0 0
    %1351 = vmatpush1.bf16.msra.mxu0 0
    %1352 = vmatprep.subr.bf16.mxu0 0
    %1353 = vmatpush1.bf16.msra.mxu0 0
    %1354 = vmatprep.subr.bf16.mxu0 0
    %1355 = vmatpush1.bf16.msra.mxu0 0
    %1356 = vmatprep.subr.bf16.mxu0 0
    %1357 = vmatpush1.bf16.msra.mxu0 0
    %1358 = vmatprep.subr.bf16.mxu0 0
    %1359 = vmatpush1.bf16.msra.mxu0 0
    %1360 = vmatprep.subr.bf16.mxu0 0
    %1361 = vmatpush1.bf16.msra.mxu0 0
    %1362 = vmatprep.subr.bf16.mxu0 0
    %1363 = vmatpush1.bf16.msra.mxu0 0
    %1364 = vmatprep.subr.bf16.mxu0 0
    %1365 = vmatpush1.bf16.msra.mxu0 0
    %1366 = vmatprep.subr.bf16.mxu0 0
    %1367 = vmatpush1.bf16.msra.mxu0 0
    %1368 = vmatprep.mubr.bf16.mxu0 0
    %1369 = vmatmul.mubr.bf16.gmra.mrb[0].mxu0 %v1285
    %v1370 = vpop.f32.mrb[0].mxu0
    %v1371 = vadd.f32 0.0, %v1370
    %v1372 = vpop.f32.mrb[0].mxu0
    %v1373 = vpop.f32.mrb[0].mxu0
    %v1374 = vpop.f32.mrb[0].mxu0
    %1375 = vdwg.mxu0
    %v1376 = vadd.f32 %v1335, %v1371
    %v1377 = vxor.u32 %v1376, 2147483648
    %v1378 = vmul.f32 %v1377, 1.442695
    %v1379 = vpow.pop %v1378
    %v1380 = vadd.f32 %v1379, 1.0
    %v1381 = vrcp.pop %v1380
    %v1382 = vmul.f32 1.0, %v1381
    %1383 = vmatprep.subr.bf16.mxu0 0
    %1384 = vmatpush1.bf16.msra.mxu0 %v254
    %1385 = vmatprep.subr.bf16.mxu0 0
    %1386 = vmatpush1.bf16.msra.mxu0 %v255
    %1387 = vmatprep.subr.bf16.mxu0 0
    %1388 = vmatpush1.bf16.msra.mxu0 0
    %1389 = vmatprep.subr.bf16.mxu0 0
    %1390 = vmatpush1.bf16.msra.mxu0 0
    %1391 = vmatprep.subr.bf16.mxu0 0
    %1392 = vmatpush1.bf16.msra.mxu0 0
    %1393 = vmatprep.subr.bf16.mxu0 0
    %1394 = vmatpush1.bf16.msra.mxu0 0
    %1395 = vmatprep.subr.bf16.mxu0 0
    %1396 = vmatpush1.bf16.msra.mxu0 0
    %1397 = vmatprep.subr.bf16.mxu0 0
    %1398 = vmatpush1.bf16.msra.mxu0 0
    %1399 = vmatprep.subr.bf16.mxu0 0
    %1400 = vmatpush1.bf16.msra.mxu0 0
    %1401 = vmatprep.subr.bf16.mxu0 0
    %1402 = vmatpush1.bf16.msra.mxu0 0
    %1403 = vmatprep.subr.bf16.mxu0 0
    %1404 = vmatpush1.bf16.msra.mxu0 0
    %1405 = vmatprep.subr.bf16.mxu0 0
    %1406 = vmatpush1.bf16.msra.mxu0 0
    %1407 = vmatprep.subr.bf16.mxu0 0
    %1408 = vmatpush1.bf16.msra.mxu0 0
    %1409 = vmatprep.subr.bf16.mxu0 0
    %1410 = vmatpush1.bf16.msra.mxu0 0
    %1411 = vmatprep.subr.bf16.mxu0 0
    %1412 = vmatpush1.bf16.msra.mxu0 0
    %1413 = vmatprep.subr.bf16.mxu0 0
    %1414 = vmatpush1.bf16.msra.mxu0 0
    %1415 = vmatprep.mubr.bf16.mxu0 0
    %1416 = vmatmul.mubr.bf16.gmra.mrb[0].mxu0 %v1285
    %v1417 = vpop.f32.mrb[0].mxu0
    %v1418 = vadd.f32 %v244, %v1417
    %v1419 = vpop.f32.mrb[0].mxu0
    %v1420 = vpop.f32.mrb[0].mxu0
    %v1421 = vpop.f32.mrb[0].mxu0
    %1422 = vdwg.mxu0
    %s1423 = scalar_lea.vmem [#allocation7], 14
    %v1424 = vld [vmem:[%s1423] sm:$0x3]
    %v1425 = vmul.f32 %v1333, %v1418
    %v1426 = vadd.f32 %v1424, %v1425
    %v1427 = vtanh.pop %v1426
    %v1428 = vsub.f32 1.0, %v1382
    %v1429 = vmul.f32 %v1428, %v1427
    %v1430 = vmul.f32 %v1382, %v1277
    %v1431 = vadd.f32 %v1429, %v1430
    %vm1432 = vcmp.gt.s32.totalorder %v102, 7
    %v1433 = vsel %vm1432, 1, 0
    %1434 = vset.pattern.permute.xlu0 0
    %1435 = vperm.xlu0 %1434, %v1433
    %v1436 = vpop.permute.xlu0 %1435
    %vm1437 = vcmp.eq.s32.totalorder %v1436, 1
    %v1438 = vsel %vm1437, %v1431, %v1277
    %v1439 = vsel %vm1437, %v1431, 0.0
    %s1440 = scalar_lea.vmem [#allocation11], 14
    %1441 = vst.msk [vmem:[%s1440] sm:$0x3] %vm313, %v1439
    %1442 = vst.msk [vmem:[#allocation12] sm:$0x3] %vm313, %v1438
    // Predicated region
    $region54: #{tpu_custom_call.1} parent=1 // pred_check
      _
    $region55: #{tpu_custom_call.1} parent=1 // pred_check_branch
      %1444 = sbr.rel (0) target = $region57
    $region56: #{tpu_custom_call.1} parent=1 // pred_region
      %s1446 = ssub.s32 256, 256
      %1447 = vsyncadd [#allocation4], %s1446
      %s1448 = sshll.u32 [#allocation11], 4
      %s1449 = int_to_ptr.vmem [resolvable:$true] %s1448
      %1454 = dma.vmem_to_hbm [thread:$0]  %s1449, 256, %s8, [#allocation4], 32, 32, 2
    $region57: #{tpu_custom_call.1} parent=1 // pred_fallthru
      _
    // Predicated region
    $region58: #{tpu_custom_call.1} parent=1 // pred_check
      _
    $region59: #{tpu_custom_call.1} parent=1 // pred_check_branch
      %1456 = sbr.rel (0) target = $region61
    $region60: #{tpu_custom_call.1} parent=1 // pred_region
      %s1458 = ssub.s32 32, 32
      %1459 = vsyncadd [#allocation13], %s1458
      %s1461 = sshll.u32 [#allocation12], 4
      %s1462 = int_to_ptr.vmem [resolvable:$true] %s1461
      %1464 = dma.vmem_to_hbm [thread:$0]  %s1462, 32, %s9, [#allocation13]
    $region61: #{tpu_custom_call.1} parent=1 // pred_fallthru
      _
    // Predicated region
    $region62: #{tpu_custom_call.1} parent=1 // pred_check
      _
    $region63: #{tpu_custom_call.1} parent=1 // pred_check_branch
      %1466 = sbr.rel (0) target = $region65
    $region64: #{tpu_custom_call.1} parent=1 // pred_region
      %1467 = dma.done [#allocation4], 256
    $region65: #{tpu_custom_call.1} parent=1 // pred_fallthru
      _
    // Predicated region
    $region66: #{tpu_custom_call.1} parent=1 // pred_check
      _
    $region67: #{tpu_custom_call.1} parent=1 // pred_check_branch
      %1469 = sbr.rel (0) target = $region69
    $region68: #{tpu_custom_call.1} parent=1 // pred_region
      %1470 = dma.done [#allocation13], 32
    $region69: #{tpu_custom_call.1} parent=1 // pred_fallthru
      _
    %1471 = vsyncpa [#allocation3], 1
    %1472 = vsyncpa [#allocation6], 1
    %1473 = vsyncpa [#allocation9], 1
    %1474 = vsyncpa [#allocation4], 1
    %1475 = vsyncpa [#allocation13], 1

</llo_original>
